<compile_context>
chip_gen: v7x
topology: tpu7x:2x2x1
jax: 0.10.0
libtpu: 0.0.40
codegen_flags: <defaults>
</compile_context>

<pallas_src>
import jax
import jax.numpy as jnp
from jax.experimental import pallas as pl
from jax.experimental.pallas import tpu as pltpu


_LANE = 128      # lane width; fused N is padded to a multiple of this
_TILE_B = 512    # max batch-tile rows (512 x 4096 bf16 = 4 MiB per x buffer)


def _fused_heads_kernel(x_ref, w_ref, b_ref, out_ref):
    """AvgPool2d(4) + flatten + (eval) Dropout + all Linear heads, fused.

    The 1/S average-pool scale and the spatial reduction are folded into the
    weight matrix (channel rows repeated S times), so the whole head collapses
    to a single lane-dense MXU matmul plus a VPU bias add:
      x_ref:   (TB, K)    bf16, K = C*S  (NCHW features, contiguous flatten)
      w_ref:   (K, Npad)  bf16, all heads concatenated, pre-scaled by 1/S
      b_ref:   (1, Npad)  f32,  all heads' biases (zero padded)
      out_ref: (TB, Npad) f32,  logits for all heads
    """
    out_ref[...] = jnp.dot(x_ref[...], w_ref[...],
                           preferred_element_type=jnp.float32) + b_ref[...]


def prepare_fused_heads(weights, biases, spatial_size):
    """One-time fusion of all classifier heads (call at init, not per forward).

    weights: list of (C, N_i) arrays (torch nn.Linear weight, transposed)
    biases:  list of (N_i,) arrays
    spatial_size: S = H*W of the feature map consumed by AvgPool2d

    Returns (w_rep, b_fused, sizes):
      w_rep:   (C*S, Npad) bf16 — heads concatenated on N, 1/S fold applied,
               each channel row repeated S times so row order matches the
               contiguous (B, C, S) -> (B, C*S) flatten, N zero-padded to 128.
      b_fused: (1, Npad) f32
      sizes:   per-head widths, for slicing the fused logits back apart.
    """
    sizes = [int(w.shape[1]) for w in weights]
    n_total = sum(sizes)
    n_pad = max(_LANE, ((n_total + _LANE - 1) // _LANE) * _LANE)

    w_fused = jnp.concatenate([w.astype(jnp.float32) for w in weights], axis=1)
    w_fused = w_fused * (1.0 / float(spatial_size))
    w_fused = jnp.pad(w_fused, ((0, 0), (0, n_pad - n_total)))
    # (C, Npad) -> (C*S, Npad): channel c occupies rows c*S .. c*S+S-1.
    w_rep = jnp.repeat(w_fused, spatial_size, axis=0).astype(jnp.bfloat16)

    b_fused = jnp.concatenate([b.astype(jnp.float32) for b in biases])[None, :]
    b_fused = jnp.pad(b_fused, ((0, 0), (0, n_pad - n_total)))
    return w_rep, b_fused, sizes


def _pick_tile_b(batch):
    if batch <= 16:
        # Single grid step; block row-count equals the full batch dim so the
        # (8,128) divisibility rule is satisfied trivially.  At this size fixed
        # pallas_call overhead dominates anyway.
        return batch
    # At least two grid steps so a v7x megacore can shard the "parallel" batch
    # axis across both TensorCores; sublane-align and cap so the bf16 x block
    # plus double buffering stays a few MiB of VMEM.
    half = -(-batch // 2)                 # ceil(batch / 2)
    half = ((half + 7) // 8) * 8          # sublane multiple
    return min(_TILE_B, half)


def inresn_multiclass_heads(x_nchw, fused_params):
    """Applies the multi-head classifier part of InResnMultiClasses.

    x_nchw: (B, C, H, W) backbone feature map (conv2d_7b output), f32 or bf16
    fused_params: output of prepare_fused_heads()
    returns: list of (B, N_i) logits (same ordering as `self.classifiers`)
    """
    w_rep, b_fused, sizes = fused_params
    B, C, H, W = x_nchw.shape
    S = H * W
    K = C * S
    assert w_rep.shape[0] == K, "fused weights prepared for a different map size"
    n_pad = w_rep.shape[1]

    # NCHW -> (B, C*S): contiguous reshape, free.  bf16 halves HBM read traffic
    # of the DMA-bound kernel; ideally the backbone already emits bf16 and this
    # cast is a no-op.
    x = x_nchw.reshape(B, K)
    if x.dtype != jnp.bfloat16:
        x = x.astype(jnp.bfloat16)

    tile_b = _pick_tile_b(B)
    grid = (pl.cdiv(B, tile_b),)
    out = pl.pallas_call(
        _fused_heads_kernel,
        out_shape=jax.ShapeDtypeStruct((B, n_pad), jnp.float32),
        grid=grid,
        in_specs=[
            pl.BlockSpec((tile_b, K), lambda i: (i, 0)),
            pl.BlockSpec((K, n_pad), lambda i: (0, 0)),
            pl.BlockSpec((1, n_pad), lambda i: (0, 0)),
        ],
        out_specs=pl.BlockSpec((tile_b, n_pad), lambda i: (i, 0)),
        compiler_params=pltpu.CompilerParams(
            dimension_semantics=("parallel",)),
    )(x, w_rep, b_fused)

    # Slice the per-head logits back out (drops the lane padding).
    outs, off = [], 0
    for n in sizes:
        outs.append(out[:, off:off + n])
        off += n
    return outs


def _init_linear_params(key, in_features, out_features):
    """Deterministic init mimicking torch nn.Linear (uniform +-1/sqrt(fan_in))."""
    kw, kb = jax.random.split(key)
    bound = 1.0 / jnp.sqrt(jnp.float32(in_features))
    # Stored already transposed: (in_features, out_features).
    w = jax.random.uniform(kw, (in_features, out_features), jnp.float32,
                           minval=-bound, maxval=bound)
    b = jax.random.uniform(kb, (out_features,), jnp.float32,
                           minval=-bound, maxval=bound)
    return w, b


if __name__ == "__main__":
    # Small, module-consistent shapes:
    #   head_size (feature channels) = 256, 4x4 spatial map (AvgPool2d(4)
    #   reduces 4x4 -> 1x1), two classifier heads [16, 8].
    head_size = 256
    H = W = 4
    num_classes = [16, 8]

    key = jax.random.PRNGKey(0)
    kx, *kheads = jax.random.split(key, 1 + len(num_classes))

    weights, biases = [], []
    for kh, n_cls in zip(kheads, num_classes):
        w, b = _init_linear_params(kh, head_size, n_cls)
        weights.append(w)
        biases.append(b)

    # Fuse / pad / scale / cast the head weights ONCE (init-time, not per call).
    fused = prepare_fused_heads(weights, biases, H * W)

    ok = True
    # B=2 exercises the tiny single-step path; B=20 exercises the tiled grid
    # path with a partial last batch block.
    for B in (2, 20):
        kx_b = jax.random.fold_in(kx, B)
        # Stand-in for the backbone (conv2d_1a ... conv2d_7b) output feature
        # map, emitted in bf16.
        x = jax.random.normal(kx_b, (B, head_size, H, W),
                              jnp.float32).astype(jnp.bfloat16)

        outs = inresn_multiclass_heads(x, fused)
        outs = [jax.block_until_ready(o) for o in outs]

        # Pure-JAX reference (eval-mode dropout == identity).  Kernel uses bf16
        # matmul operands with f32 accumulation; allow a small tolerance vs the
        # f32-weight reference.
        pooled_ref = jnp.mean(
            x.astype(jnp.float32).reshape(B, head_size, H * W), axis=-1)
        for o, w, b in zip(outs, weights, biases):
            ref = pooled_ref @ w + b
            ok &= (o.shape == ref.shape)
            ok &= bool(jnp.allclose(o, ref, atol=2e-2, rtol=2e-2))

    assert ok, "Pallas fused-head output mismatch vs JAX reference"
    print("KERNEL_OK")
</pallas_src>

<mosaic_0001>
module attributes {stable_mosaic.version = 11 : i64} {
  func.func @_fused_heads_kernel(%arg0: i32, %arg1: memref<2x4096xbf16, #tpu.memory_space<vmem>>, %arg2: memref<4096x128xbf16, #tpu.memory_space<vmem>>, %arg3: memref<1x128xf32, #tpu.memory_space<vmem>>, %arg4: memref<2x128xf32, #tpu.memory_space<vmem>>) attributes {dimension_semantics = [#tpu.dimension_semantics<parallel>], iteration_bounds = array<i64: 1>, scalar_prefetch = 0 : i64, scratch_operands = 0 : i64, tpu.core_type = #tpu.core_type<tc>, window_params = [{transform_indices = @transform_0, window_bounds = array<i64: 2, 4096>}, {pipeline_mode = #tpu.pipeline_mode<synchronous>, transform_indices = @transform_1, window_bounds = array<i64: 4096, 128>}, {pipeline_mode = #tpu.pipeline_mode<synchronous>, transform_indices = @transform_2, window_bounds = array<i64: 1, 128>}, {transform_indices = @transform_3, window_bounds = array<i64: 2, 128>}]} {
    %c0 = arith.constant 0 : index
    %c0_0 = arith.constant 0 : index
    %0 = vector.load %arg1[%c0, %c0_0] : memref<2x4096xbf16, #tpu.memory_space<vmem>>, vector<2x4096xbf16>
    %c0_1 = arith.constant 0 : index
    %c0_2 = arith.constant 0 : index
    %1 = vector.load %arg2[%c0_1, %c0_2] : memref<4096x128xbf16, #tpu.memory_space<vmem>>, vector<4096x128xbf16>
    %cst = arith.constant dense<0.000000e+00> : vector<2x128xf32>
    %2 = tpu.matmul %0, %1, %cst {dimension_numbers = #tpu.dot_dimension_numbers<[1], [0], [0], [1], [0, 0, 1, 1], [], []>} : vector<2x4096xbf16>, vector<4096x128xbf16>, vector<2x128xf32> -> vector<2x128xf32>
    %c0_3 = arith.constant 0 : index
    %c0_4 = arith.constant 0 : index
    %3 = vector.load %arg3[%c0_3, %c0_4] : memref<1x128xf32, #tpu.memory_space<vmem>>, vector<1x128xf32>
    %4 = vector.broadcast %3 : vector<1x128xf32> to vector<2x128xf32>
    %5 = arith.addf %2, %4 : vector<2x128xf32>
    %c0_5 = arith.constant 0 : index
    %c0_6 = arith.constant 0 : index
    %6 = vector.load %arg4[%c0_5, %c0_6] : memref<2x128xf32, #tpu.memory_space<vmem>>, vector<2x128xf32>
    tpu.vector_store %arg4[%c0_5, %c0_6], %5 {strides = array<i32>} : memref<2x128xf32, #tpu.memory_space<vmem>>, vector<2x128xf32>,
    return
  }
  func.func @transform_0(%arg0: i32) -> (i32, i32) {
    %c0_i32 = arith.constant 0 : i32
    %c0_i32_0 = arith.constant 0 : i32
    return %arg0, %c0_i32 : i32, i32
  }
  func.func @transform_1(%arg0: i32) -> (i32, i32) {
    %c0_i32 = arith.constant 0 : i32
    %c0_i32_0 = arith.constant 0 : i32
    %c0_i32_1 = arith.constant 0 : i32
    return %c0_i32, %c0_i32_0 : i32, i32
  }
  func.func @transform_2(%arg0: i32) -> (i32, i32) {
    %c0_i32 = arith.constant 0 : i32
    %c0_i32_0 = arith.constant 0 : i32
    %c0_i32_1 = arith.constant 0 : i32
    return %c0_i32, %c0_i32_0 : i32, i32
  }
  func.func @transform_3(%arg0: i32) -> (i32, i32) {
    %c0_i32 = arith.constant 0 : i32
    %c0_i32_0 = arith.constant 0 : i32
    return %arg0, %c0_i32 : i32, i32
  }
}

</mosaic_0001>

<llo_original>
// kernel: tpu_custom_call.1
$region0: #{tpu_custom_call.1}
  #allocation0 [shape = 'u32[]', space=smem, size = 0x4, offset = 0x4, fixed_abs, tag = 'smem constant byte address 0x4 - core index']
  #allocation1 [shape = 'u32[144,128]{1,0:T(1,128)}', space=vmem, size = 0x12000, scoped, tag = 'internal scratch']
  %s0 = inlined_call_operand.hbm [shape: bf16[2,4096], index: 0, kind: input, shape index: {}]
  %s1 = inlined_call_operand.hbm [shape: bf16[4096,128], index: 1, kind: input, shape index: {}]
  %s2 = inlined_call_operand.vmem [shape: f32[1,128], index: 2, kind: input, shape index: {}]
  %s3 = inlined_call_operand.hbm [shape: f32[2,128], index: 3, kind: output, shape index: {}]
  %s4 = sld [smem:[#allocation0]]
  $region30: #{tpu_custom_call.1} parent=0
    _
  %s6 = ssub.s32 1, %s4
  %s7 = scalar_select 0, %s6, %s4
  $region1: #{tpu_custom_call.1} parent=0
    #allocation2 [shape = 'u8[16384]{0}', space=vmem, size = 0x4000, scoped, tag = 'input window, operand 0, single buffered']
    #allocation3 [shape = 's32[1]{0}', space=sflag, size = 0x4, scoped, tag = 'scoped memory for tpu_custom_call.1']
    #allocation4 [shape = 's32[1]{0}', space=sflag, size = 0x4, scoped, tag = 'scoped memory for tpu_custom_call.1']
    #allocation5 [shape = 'u8[1048576]{0}', space=vmem, size = 0x100000, scoped, tag = 'input window, operand 1, single buffered']
    #allocation6 [shape = 's32[1]{0}', space=sflag, size = 0x4, scoped, tag = 'scoped memory for tpu_custom_call.1']
    #allocation7 [shape = 'u8[1024]{0}', space=vmem, size = 0x400, scoped, tag = 'output window, operand 0, single buffered']
    %8 = vsyncpa [#allocation3], 0
    %9 = vsyncpa [#allocation6], 0
    %10 = vsyncpa [#allocation4], 0
    // Predicated region
    $region2: #{tpu_custom_call.1} parent=1 // pred_check
      _
    $region3: #{tpu_custom_call.1} parent=1 // pred_check_branch
      %12 = sbr.rel (0) target = $region5
    $region4: #{tpu_custom_call.1} parent=1 // pred_region
      %s14 = ssub.s32 512, 512
      %15 = vsyncadd [#allocation3], %s14
      %s17 = sshll.u32 [#allocation2], 4
      %s18 = int_to_ptr.vmem [resolvable:$true] %s17
      %20 = dma.hbm_to_vmem [thread:$0]  %s0, 512, %s18, [#allocation3]
    $region5: #{tpu_custom_call.1} parent=1 // pred_fallthru
      _
    // Predicated region
    $region6: #{tpu_custom_call.1} parent=1 // pred_check
      _
    $region7: #{tpu_custom_call.1} parent=1 // pred_check_branch
      %22 = sbr.rel (0) target = $region9
    $region8: #{tpu_custom_call.1} parent=1 // pred_region
      %s24 = ssub.s32 32768, 32768
      %25 = vsyncadd [#allocation6], %s24
      %s26 = sshll.u32 [#allocation5], 4
      %s27 = int_to_ptr.vmem [resolvable:$true] %s26
      %32 = dma.hbm_to_vmem [thread:$0]  %s1, 32768, %s27, [#allocation6], 64, 64, 4
    $region9: #{tpu_custom_call.1} parent=1 // pred_fallthru
      _
    // Predicated region
    $region10: #{tpu_custom_call.1} parent=1 // pred_check
      _
    $region11: #{tpu_custom_call.1} parent=1 // pred_check_branch
      %34 = sbr.rel (0) target = $region13
    $region12: #{tpu_custom_call.1} parent=1 // pred_region
      _
    $region13: #{tpu_custom_call.1} parent=1 // pred_fallthru
      _
    // Predicated region
    $region14: #{tpu_custom_call.1} parent=1 // pred_check
      _
    $region15: #{tpu_custom_call.1} parent=1 // pred_check_branch
      %36 = sbr.rel (0) target = $region17
    $region16: #{tpu_custom_call.1} parent=1 // pred_region
      %37 = dma.done [#allocation3], 512
    $region17: #{tpu_custom_call.1} parent=1 // pred_fallthru
      _
    // Predicated region
    $region18: #{tpu_custom_call.1} parent=1 // pred_check
      _
    $region19: #{tpu_custom_call.1} parent=1 // pred_check_branch
      %39 = sbr.rel (0) target = $region21
    $region20: #{tpu_custom_call.1} parent=1 // pred_region
      %40 = dma.done [#allocation6], 32768
    $region21: #{tpu_custom_call.1} parent=1 // pred_fallthru
      _
    %v42 = vld [vmem:[#allocation2] sm:$0xff]
    %v43 = vld [vmem:[#allocation2 + $0x8] sm:$0xff]
    %v44 = vld [vmem:[#allocation2 + $0x10] sm:$0xff]
    %v45 = vld [vmem:[#allocation2 + $0x18] sm:$0xff]
    %v46 = vld [vmem:[#allocation5] sm:$0xf]
    %v47 = vld [vmem:[#allocation5 + $0x4] sm:$0xf]
    %v48 = vld [vmem:[#allocation5 + $0x8] sm:$0xf]
    %v49 = vld [vmem:[#allocation5 + $0xc] sm:$0xf]
    %v50 = vld [vmem:[#allocation5 + $0x10] sm:$0xf]
    %v51 = vld [vmem:[#allocation5 + $0x14] sm:$0xf]
    %v52 = vld [vmem:[#allocation5 + $0x18] sm:$0xf]
    %v53 = vld [vmem:[#allocation5 + $0x1c] sm:$0xf]
    %v54 = vld [vmem:[#allocation5 + $0x20] sm:$0xf]
    %v55 = vld [vmem:[#allocation5 + $0x24] sm:$0xf]
    %v56 = vld [vmem:[#allocation5 + $0x28] sm:$0xf]
    %v57 = vld [vmem:[#allocation5 + $0x2c] sm:$0xf]
    %v58 = vld [vmem:[#allocation5 + $0x30] sm:$0xf]
    %v59 = vld [vmem:[#allocation5 + $0x34] sm:$0xf]
    %v60 = vld [vmem:[#allocation5 + $0x38] sm:$0xf]
    %v61 = vld [vmem:[#allocation5 + $0x3c] sm:$0xf]
    %v62 = vld [vmem:[#allocation5 + $0x40] sm:$0xf]
    %v63 = vld [vmem:[#allocation5 + $0x44] sm:$0xf]
    %v64 = vld [vmem:[#allocation5 + $0x48] sm:$0xf]
    %v65 = vld [vmem:[#allocation5 + $0x4c] sm:$0xf]
    %v66 = vld [vmem:[#allocation5 + $0x50] sm:$0xf]
    %v67 = vld [vmem:[#allocation5 + $0x54] sm:$0xf]
    %v68 = vld [vmem:[#allocation5 + $0x58] sm:$0xf]
    %v69 = vld [vmem:[#allocation5 + $0x5c] sm:$0xf]
    %v70 = vld [vmem:[#allocation5 + $0x60] sm:$0xf]
    %v71 = vld [vmem:[#allocation5 + $0x64] sm:$0xf]
    %v72 = vld [vmem:[#allocation5 + $0x68] sm:$0xf]
    %v73 = vld [vmem:[#allocation5 + $0x6c] sm:$0xf]
    %v74 = vld [vmem:[#allocation5 + $0x70] sm:$0xf]
    %v75 = vld [vmem:[#allocation5 + $0x74] sm:$0xf]
    %v76 = vld [vmem:[#allocation5 + $0x78] sm:$0xf]
    %v77 = vld [vmem:[#allocation5 + $0x7c] sm:$0xf]
    %v78 = vld [vmem:[#allocation5 + $0x80] sm:$0xf]
    %v79 = vld [vmem:[#allocation5 + $0x84] sm:$0xf]
    %v80 = vld [vmem:[#allocation5 + $0x88] sm:$0xf]
    %v81 = vld [vmem:[#allocation5 + $0x8c] sm:$0xf]
    %v82 = vld [vmem:[#allocation5 + $0x90] sm:$0xf]
    %v83 = vld [vmem:[#allocation5 + $0x94] sm:$0xf]
    %v84 = vld [vmem:[#allocation5 + $0x98] sm:$0xf]
    %v85 = vld [vmem:[#allocation5 + $0x9c] sm:$0xf]
    %v86 = vld [vmem:[#allocation5 + $0xa0] sm:$0xf]
    %v87 = vld [vmem:[#allocation5 + $0xa4] sm:$0xf]
    %v88 = vld [vmem:[#allocation5 + $0xa8] sm:$0xf]
    %v89 = vld [vmem:[#allocation5 + $0xac] sm:$0xf]
    %v90 = vld [vmem:[#allocation5 + $0xb0] sm:$0xf]
    %v91 = vld [vmem:[#allocation5 + $0xb4] sm:$0xf]
    %v92 = vld [vmem:[#allocation5 + $0xb8] sm:$0xf]
    %v93 = vld [vmem:[#allocation5 + $0xbc] sm:$0xf]
    %v94 = vld [vmem:[#allocation5 + $0xc0] sm:$0xf]
    %v95 = vld [vmem:[#allocation5 + $0xc4] sm:$0xf]
    %v96 = vld [vmem:[#allocation5 + $0xc8] sm:$0xf]
    %v97 = vld [vmem:[#allocation5 + $0xcc] sm:$0xf]
    %v98 = vld [vmem:[#allocation5 + $0xd0] sm:$0xf]
    %v99 = vld [vmem:[#allocation5 + $0xd4] sm:$0xf]
    %v100 = vld [vmem:[#allocation5 + $0xd8] sm:$0xf]
    %v101 = vld [vmem:[#allocation5 + $0xdc] sm:$0xf]
    %v102 = vld [vmem:[#allocation5 + $0xe0] sm:$0xf]
    %v103 = vld [vmem:[#allocation5 + $0xe4] sm:$0xf]
    %v104 = vld [vmem:[#allocation5 + $0xe8] sm:$0xf]
    %v105 = vld [vmem:[#allocation5 + $0xec] sm:$0xf]
    %v106 = vld [vmem:[#allocation5 + $0xf0] sm:$0xf]
    %v107 = vld [vmem:[#allocation5 + $0xf4] sm:$0xf]
    %v108 = vld [vmem:[#allocation5 + $0xf8] sm:$0xf]
    %v109 = vld [vmem:[#allocation5 + $0xfc] sm:$0xf]
    %v110 = vld [vmem:[#allocation5 + $0x100] sm:$0xf]
    %v111 = vld [vmem:[#allocation5 + $0x104] sm:$0xf]
    %v112 = vld [vmem:[#allocation5 + $0x108] sm:$0xf]
    %v113 = vld [vmem:[#allocation5 + $0x10c] sm:$0xf]
    %v114 = vld [vmem:[#allocation5 + $0x110] sm:$0xf]
    %v115 = vld [vmem:[#allocation5 + $0x114] sm:$0xf]
    %v116 = vld [vmem:[#allocation5 + $0x118] sm:$0xf]
    %v117 = vld [vmem:[#allocation5 + $0x11c] sm:$0xf]
    %v118 = vld [vmem:[#allocation5 + $0x120] sm:$0xf]
    %v119 = vld [vmem:[#allocation5 + $0x124] sm:$0xf]
    %v120 = vld [vmem:[#allocation5 + $0x128] sm:$0xf]
    %v121 = vld [vmem:[#allocation5 + $0x12c] sm:$0xf]
    %v122 = vld [vmem:[#allocation5 + $0x130] sm:$0xf]
    %v123 = vld [vmem:[#allocation5 + $0x134] sm:$0xf]
    %v124 = vld [vmem:[#allocation5 + $0x138] sm:$0xf]
    %v125 = vld [vmem:[#allocation5 + $0x13c] sm:$0xf]
    %v126 = vld [vmem:[#allocation5 + $0x140] sm:$0xf]
    %v127 = vld [vmem:[#allocation5 + $0x144] sm:$0xf]
    %v128 = vld [vmem:[#allocation5 + $0x148] sm:$0xf]
    %v129 = vld [vmem:[#allocation5 + $0x14c] sm:$0xf]
    %v130 = vld [vmem:[#allocation5 + $0x150] sm:$0xf]
    %v131 = vld [vmem:[#allocation5 + $0x154] sm:$0xf]
    %v132 = vld [vmem:[#allocation5 + $0x158] sm:$0xf]
    %v133 = vld [vmem:[#allocation5 + $0x15c] sm:$0xf]
    %v134 = vld [vmem:[#allocation5 + $0x160] sm:$0xf]
    %v135 = vld [vmem:[#allocation5 + $0x164] sm:$0xf]
    %v136 = vld [vmem:[#allocation5 + $0x168] sm:$0xf]
    %v137 = vld [vmem:[#allocation5 + $0x16c] sm:$0xf]
    %v138 = vld [vmem:[#allocation5 + $0x170] sm:$0xf]
    %v139 = vld [vmem:[#allocation5 + $0x174] sm:$0xf]
    %v140 = vld [vmem:[#allocation5 + $0x178] sm:$0xf]
    %v141 = vld [vmem:[#allocation5 + $0x17c] sm:$0xf]
    %v142 = vld [vmem:[#allocation5 + $0x180] sm:$0xf]
    %v143 = vld [vmem:[#allocation5 + $0x184] sm:$0xf]
    %v144 = vld [vmem:[#allocation5 + $0x188] sm:$0xf]
    %v145 = vld [vmem:[#allocation5 + $0x18c] sm:$0xf]
    %v146 = vld [vmem:[#allocation5 + $0x190] sm:$0xf]
    %v147 = vld [vmem:[#allocation5 + $0x194] sm:$0xf]
    %v148 = vld [vmem:[#allocation5 + $0x198] sm:$0xf]
    %v149 = vld [vmem:[#allocation5 + $0x19c] sm:$0xf]
    %v150 = vld [vmem:[#allocation5 + $0x1a0] sm:$0xf]
    %v151 = vld [vmem:[#allocation5 + $0x1a4] sm:$0xf]
    %v152 = vld [vmem:[#allocation5 + $0x1a8] sm:$0xf]
    %v153 = vld [vmem:[#allocation5 + $0x1ac] sm:$0xf]
    %v154 = vld [vmem:[#allocation5 + $0x1b0] sm:$0xf]
    %v155 = vld [vmem:[#allocation5 + $0x1b4] sm:$0xf]
    %v156 = vld [vmem:[#allocation5 + $0x1b8] sm:$0xf]
    %v157 = vld [vmem:[#allocation5 + $0x1bc] sm:$0xf]
    %v158 = vld [vmem:[#allocation5 + $0x1c0] sm:$0xf]
    %v159 = vld [vmem:[#allocation5 + $0x1c4] sm:$0xf]
    %v160 = vld [vmem:[#allocation5 + $0x1c8] sm:$0xf]
    %v161 = vld [vmem:[#allocation5 + $0x1cc] sm:$0xf]
    %v162 = vld [vmem:[#allocation5 + $0x1d0] sm:$0xf]
    %v163 = vld [vmem:[#allocation5 + $0x1d4] sm:$0xf]
    %v164 = vld [vmem:[#allocation5 + $0x1d8] sm:$0xf]
    %v165 = vld [vmem:[#allocation5 + $0x1dc] sm:$0xf]
    %v166 = vld [vmem:[#allocation5 + $0x1e0] sm:$0xf]
    %v167 = vld [vmem:[#allocation5 + $0x1e4] sm:$0xf]
    %v168 = vld [vmem:[#allocation5 + $0x1e8] sm:$0xf]
    %v169 = vld [vmem:[#allocation5 + $0x1ec] sm:$0xf]
    %v170 = vld [vmem:[#allocation5 + $0x1f0] sm:$0xf]
    %v171 = vld [vmem:[#allocation5 + $0x1f4] sm:$0xf]
    %v172 = vld [vmem:[#allocation5 + $0x1f8] sm:$0xf]
    %v173 = vld [vmem:[#allocation5 + $0x1fc] sm:$0xf]
    %v174 = vld [vmem:[#allocation5 + $0x200] sm:$0xf]
    %v175 = vld [vmem:[#allocation5 + $0x204] sm:$0xf]
    %v176 = vld [vmem:[#allocation5 + $0x208] sm:$0xf]
    %v177 = vld [vmem:[#allocation5 + $0x20c] sm:$0xf]
    %v178 = vld [vmem:[#allocation5 + $0x210] sm:$0xf]
    %v179 = vld [vmem:[#allocation5 + $0x214] sm:$0xf]
    %v180 = vld [vmem:[#allocation5 + $0x218] sm:$0xf]
    %v181 = vld [vmem:[#allocation5 + $0x21c] sm:$0xf]
    %v182 = vld [vmem:[#allocation5 + $0x220] sm:$0xf]
    %v183 = vld [vmem:[#allocation5 + $0x224] sm:$0xf]
    %v184 = vld [vmem:[#allocation5 + $0x228] sm:$0xf]
    %v185 = vld [vmem:[#allocation5 + $0x22c] sm:$0xf]
    %v186 = vld [vmem:[#allocation5 + $0x230] sm:$0xf]
    %v187 = vld [vmem:[#allocation5 + $0x234] sm:$0xf]
    %v188 = vld [vmem:[#allocation5 + $0x238] sm:$0xf]
    %v189 = vld [vmem:[#allocation5 + $0x23c] sm:$0xf]
    %v190 = vld [vmem:[#allocation5 + $0x240] sm:$0xf]
    %v191 = vld [vmem:[#allocation5 + $0x244] sm:$0xf]
    %v192 = vld [vmem:[#allocation5 + $0x248] sm:$0xf]
    %v193 = vld [vmem:[#allocation5 + $0x24c] sm:$0xf]
    %v194 = vld [vmem:[#allocation5 + $0x250] sm:$0xf]
    %v195 = vld [vmem:[#allocation5 + $0x254] sm:$0xf]
    %v196 = vld [vmem:[#allocation5 + $0x258] sm:$0xf]
    %v197 = vld [vmem:[#allocation5 + $0x25c] sm:$0xf]
    %v198 = vld [vmem:[#allocation5 + $0x260] sm:$0xf]
    %v199 = vld [vmem:[#allocation5 + $0x264] sm:$0xf]
    %v200 = vld [vmem:[#allocation5 + $0x268] sm:$0xf]
    %v201 = vld [vmem:[#allocation5 + $0x26c] sm:$0xf]
    %v202 = vld [vmem:[#allocation5 + $0x270] sm:$0xf]
    %v203 = vld [vmem:[#allocation5 + $0x274] sm:$0xf]
    %v204 = vld [vmem:[#allocation5 + $0x278] sm:$0xf]
    %v205 = vld [vmem:[#allocation5 + $0x27c] sm:$0xf]
    %v206 = vld [vmem:[#allocation5 + $0x280] sm:$0xf]
    %v207 = vld [vmem:[#allocation5 + $0x284] sm:$0xf]
    %v208 = vld [vmem:[#allocation5 + $0x288] sm:$0xf]
    %v209 = vld [vmem:[#allocation5 + $0x28c] sm:$0xf]
    %v210 = vld [vmem:[#allocation5 + $0x290] sm:$0xf]
    %v211 = vld [vmem:[#allocation5 + $0x294] sm:$0xf]
    %v212 = vld [vmem:[#allocation5 + $0x298] sm:$0xf]
    %v213 = vld [vmem:[#allocation5 + $0x29c] sm:$0xf]
    %v214 = vld [vmem:[#allocation5 + $0x2a0] sm:$0xf]
    %v215 = vld [vmem:[#allocation5 + $0x2a4] sm:$0xf]
    %v216 = vld [vmem:[#allocation5 + $0x2a8] sm:$0xf]
    %v217 = vld [vmem:[#allocation5 + $0x2ac] sm:$0xf]
    %v218 = vld [vmem:[#allocation5 + $0x2b0] sm:$0xf]
    %v219 = vld [vmem:[#allocation5 + $0x2b4] sm:$0xf]
    %v220 = vld [vmem:[#allocation5 + $0x2b8] sm:$0xf]
    %v221 = vld [vmem:[#allocation5 + $0x2bc] sm:$0xf]
    %v222 = vld [vmem:[#allocation5 + $0x2c0] sm:$0xf]
    %v223 = vld [vmem:[#allocation5 + $0x2c4] sm:$0xf]
    %v224 = vld [vmem:[#allocation5 + $0x2c8] sm:$0xf]
    %v225 = vld [vmem:[#allocation5 + $0x2cc] sm:$0xf]
    %v226 = vld [vmem:[#allocation5 + $0x2d0] sm:$0xf]
    %v227 = vld [vmem:[#allocation5 + $0x2d4] sm:$0xf]
    %v228 = vld [vmem:[#allocation5 + $0x2d8] sm:$0xf]
    %v229 = vld [vmem:[#allocation5 + $0x2dc] sm:$0xf]
    %v230 = vld [vmem:[#allocation5 + $0x2e0] sm:$0xf]
    %v231 = vld [vmem:[#allocation5 + $0x2e4] sm:$0xf]
    %v232 = vld [vmem:[#allocation5 + $0x2e8] sm:$0xf]
    %v233 = vld [vmem:[#allocation5 + $0x2ec] sm:$0xf]
    %v234 = vld [vmem:[#allocation5 + $0x2f0] sm:$0xf]
    %v235 = vld [vmem:[#allocation5 + $0x2f4] sm:$0xf]
    %v236 = vld [vmem:[#allocation5 + $0x2f8] sm:$0xf]
    %v237 = vld [vmem:[#allocation5 + $0x2fc] sm:$0xf]
    %v238 = vld [vmem:[#allocation5 + $0x300] sm:$0xf]
    %v239 = vld [vmem:[#allocation5 + $0x304] sm:$0xf]
    %v240 = vld [vmem:[#allocation5 + $0x308] sm:$0xf]
    %v241 = vld [vmem:[#allocation5 + $0x30c] sm:$0xf]
    %v242 = vld [vmem:[#allocation5 + $0x310] sm:$0xf]
    %v243 = vld [vmem:[#allocation5 + $0x314] sm:$0xf]
    %v244 = vld [vmem:[#allocation5 + $0x318] sm:$0xf]
    %v245 = vld [vmem:[#allocation5 + $0x31c] sm:$0xf]
    %v246 = vld [vmem:[#allocation5 + $0x320] sm:$0xf]
    %v247 = vld [vmem:[#allocation5 + $0x324] sm:$0xf]
    %v248 = vld [vmem:[#allocation5 + $0x328] sm:$0xf]
    %v249 = vld [vmem:[#allocation5 + $0x32c] sm:$0xf]
    %v250 = vld [vmem:[#allocation5 + $0x330] sm:$0xf]
    %v251 = vld [vmem:[#allocation5 + $0x334] sm:$0xf]
    %v252 = vld [vmem:[#allocation5 + $0x338] sm:$0xf]
    %v253 = vld [vmem:[#allocation5 + $0x33c] sm:$0xf]
    %v254 = vld [vmem:[#allocation5 + $0x340] sm:$0xf]
    %v255 = vld [vmem:[#allocation5 + $0x344] sm:$0xf]
    %v256 = vld [vmem:[#allocation5 + $0x348] sm:$0xf]
    %v257 = vld [vmem:[#allocation5 + $0x34c] sm:$0xf]
    %v258 = vld [vmem:[#allocation5 + $0x350] sm:$0xf]
    %v259 = vld [vmem:[#allocation5 + $0x354] sm:$0xf]
    %v260 = vld [vmem:[#allocation5 + $0x358] sm:$0xf]
    %v261 = vld [vmem:[#allocation5 + $0x35c] sm:$0xf]
    %v262 = vld [vmem:[#allocation5 + $0x360] sm:$0xf]
    %v263 = vld [vmem:[#allocation5 + $0x364] sm:$0xf]
    %v264 = vld [vmem:[#allocation5 + $0x368] sm:$0xf]
    %v265 = vld [vmem:[#allocation5 + $0x36c] sm:$0xf]
    %v266 = vld [vmem:[#allocation5 + $0x370] sm:$0xf]
    %v267 = vld [vmem:[#allocation5 + $0x374] sm:$0xf]
    %v268 = vld [vmem:[#allocation5 + $0x378] sm:$0xf]
    %v269 = vld [vmem:[#allocation5 + $0x37c] sm:$0xf]
    %v270 = vld [vmem:[#allocation5 + $0x380] sm:$0xf]
    %v271 = vld [vmem:[#allocation5 + $0x384] sm:$0xf]
    %v272 = vld [vmem:[#allocation5 + $0x388] sm:$0xf]
    %v273 = vld [vmem:[#allocation5 + $0x38c] sm:$0xf]
    %v274 = vld [vmem:[#allocation5 + $0x390] sm:$0xf]
    %v275 = vld [vmem:[#allocation5 + $0x394] sm:$0xf]
    %v276 = vld [vmem:[#allocation5 + $0x398] sm:$0xf]
    %v277 = vld [vmem:[#allocation5 + $0x39c] sm:$0xf]
    %v278 = vld [vmem:[#allocation5 + $0x3a0] sm:$0xf]
    %v279 = vld [vmem:[#allocation5 + $0x3a4] sm:$0xf]
    %v280 = vld [vmem:[#allocation5 + $0x3a8] sm:$0xf]
    %v281 = vld [vmem:[#allocation5 + $0x3ac] sm:$0xf]
    %v282 = vld [vmem:[#allocation5 + $0x3b0] sm:$0xf]
    %v283 = vld [vmem:[#allocation5 + $0x3b4] sm:$0xf]
    %v284 = vld [vmem:[#allocation5 + $0x3b8] sm:$0xf]
    %v285 = vld [vmem:[#allocation5 + $0x3bc] sm:$0xf]
    %v286 = vld [vmem:[#allocation5 + $0x3c0] sm:$0xf]
    %v287 = vld [vmem:[#allocation5 + $0x3c4] sm:$0xf]
    %v288 = vld [vmem:[#allocation5 + $0x3c8] sm:$0xf]
    %v289 = vld [vmem:[#allocation5 + $0x3cc] sm:$0xf]
    %v290 = vld [vmem:[#allocation5 + $0x3d0] sm:$0xf]
    %v291 = vld [vmem:[#allocation5 + $0x3d4] sm:$0xf]
    %v292 = vld [vmem:[#allocation5 + $0x3d8] sm:$0xf]
    %v293 = vld [vmem:[#allocation5 + $0x3dc] sm:$0xf]
    %v294 = vld [vmem:[#allocation5 + $0x3e0] sm:$0xf]
    %v295 = vld [vmem:[#allocation5 + $0x3e4] sm:$0xf]
    %v296 = vld [vmem:[#allocation5 + $0x3e8] sm:$0xf]
    %v297 = vld [vmem:[#allocation5 + $0x3ec] sm:$0xf]
    %v298 = vld [vmem:[#allocation5 + $0x3f0] sm:$0xf]
    %v299 = vld [vmem:[#allocation5 + $0x3f4] sm:$0xf]
    %v300 = vld [vmem:[#allocation5 + $0x3f8] sm:$0xf]
    %v301 = vld [vmem:[#allocation5 + $0x3fc] sm:$0xf]
    %v302 = vld [vmem:[#allocation5 + $0x400] sm:$0xf]
    %v303 = vld [vmem:[#allocation5 + $0x404] sm:$0xf]
    %v304 = vld [vmem:[#allocation5 + $0x408] sm:$0xf]
    %v305 = vld [vmem:[#allocation5 + $0x40c] sm:$0xf]
    %v306 = vld [vmem:[#allocation5 + $0x410] sm:$0xf]
    %v307 = vld [vmem:[#allocation5 + $0x414] sm:$0xf]
    %v308 = vld [vmem:[#allocation5 + $0x418] sm:$0xf]
    %v309 = vld [vmem:[#allocation5 + $0x41c] sm:$0xf]
    %v310 = vld [vmem:[#allocation5 + $0x420] sm:$0xf]
    %v311 = vld [vmem:[#allocation5 + $0x424] sm:$0xf]
    %v312 = vld [vmem:[#allocation5 + $0x428] sm:$0xf]
    %v313 = vld [vmem:[#allocation5 + $0x42c] sm:$0xf]
    %v314 = vld [vmem:[#allocation5 + $0x430] sm:$0xf]
    %v315 = vld [vmem:[#allocation5 + $0x434] sm:$0xf]
    %v316 = vld [vmem:[#allocation5 + $0x438] sm:$0xf]
    %v317 = vld [vmem:[#allocation5 + $0x43c] sm:$0xf]
    %v318 = vld [vmem:[#allocation5 + $0x440] sm:$0xf]
    %v319 = vld [vmem:[#allocation5 + $0x444] sm:$0xf]
    %v320 = vld [vmem:[#allocation5 + $0x448] sm:$0xf]
    %v321 = vld [vmem:[#allocation5 + $0x44c] sm:$0xf]
    %v322 = vld [vmem:[#allocation5 + $0x450] sm:$0xf]
    %v323 = vld [vmem:[#allocation5 + $0x454] sm:$0xf]
    %v324 = vld [vmem:[#allocation5 + $0x458] sm:$0xf]
    %v325 = vld [vmem:[#allocation5 + $0x45c] sm:$0xf]
    %v326 = vld [vmem:[#allocation5 + $0x460] sm:$0xf]
    %v327 = vld [vmem:[#allocation5 + $0x464] sm:$0xf]
    %v328 = vld [vmem:[#allocation5 + $0x468] sm:$0xf]
    %v329 = vld [vmem:[#allocation5 + $0x46c] sm:$0xf]
    %v330 = vld [vmem:[#allocation5 + $0x470] sm:$0xf]
    %v331 = vld [vmem:[#allocation5 + $0x474] sm:$0xf]
    %v332 = vld [vmem:[#allocation5 + $0x478] sm:$0xf]
    %v333 = vld [vmem:[#allocation5 + $0x47c] sm:$0xf]
    %v334 = vld [vmem:[#allocation5 + $0x480] sm:$0xf]
    %v335 = vld [vmem:[#allocation5 + $0x484] sm:$0xf]
    %v336 = vld [vmem:[#allocation5 + $0x488] sm:$0xf]
    %v337 = vld [vmem:[#allocation5 + $0x48c] sm:$0xf]
    %v338 = vld [vmem:[#allocation5 + $0x490] sm:$0xf]
    %v339 = vld [vmem:[#allocation5 + $0x494] sm:$0xf]
    %v340 = vld [vmem:[#allocation5 + $0x498] sm:$0xf]
    %v341 = vld [vmem:[#allocation5 + $0x49c] sm:$0xf]
    %v342 = vld [vmem:[#allocation5 + $0x4a0] sm:$0xf]
    %v343 = vld [vmem:[#allocation5 + $0x4a4] sm:$0xf]
    %v344 = vld [vmem:[#allocation5 + $0x4a8] sm:$0xf]
    %v345 = vld [vmem:[#allocation5 + $0x4ac] sm:$0xf]
    %v346 = vld [vmem:[#allocation5 + $0x4b0] sm:$0xf]
    %v347 = vld [vmem:[#allocation5 + $0x4b4] sm:$0xf]
    %v348 = vld [vmem:[#allocation5 + $0x4b8] sm:$0xf]
    %v349 = vld [vmem:[#allocation5 + $0x4bc] sm:$0xf]
    %v350 = vld [vmem:[#allocation5 + $0x4c0] sm:$0xf]
    %v351 = vld [vmem:[#allocation5 + $0x4c4] sm:$0xf]
    %v352 = vld [vmem:[#allocation5 + $0x4c8] sm:$0xf]
    %v353 = vld [vmem:[#allocation5 + $0x4cc] sm:$0xf]
    %v354 = vld [vmem:[#allocation5 + $0x4d0] sm:$0xf]
    %v355 = vld [vmem:[#allocation5 + $0x4d4] sm:$0xf]
    %v356 = vld [vmem:[#allocation5 + $0x4d8] sm:$0xf]
    %v357 = vld [vmem:[#allocation5 + $0x4dc] sm:$0xf]
    %v358 = vld [vmem:[#allocation5 + $0x4e0] sm:$0xf]
    %v359 = vld [vmem:[#allocation5 + $0x4e4] sm:$0xf]
    %v360 = vld [vmem:[#allocation5 + $0x4e8] sm:$0xf]
    %v361 = vld [vmem:[#allocation5 + $0x4ec] sm:$0xf]
    %v362 = vld [vmem:[#allocation5 + $0x4f0] sm:$0xf]
    %v363 = vld [vmem:[#allocation5 + $0x4f4] sm:$0xf]
    %v364 = vld [vmem:[#allocation5 + $0x4f8] sm:$0xf]
    %v365 = vld [vmem:[#allocation5 + $0x4fc] sm:$0xf]
    %v366 = vld [vmem:[#allocation5 + $0x500] sm:$0xf]
    %v367 = vld [vmem:[#allocation5 + $0x504] sm:$0xf]
    %v368 = vld [vmem:[#allocation5 + $0x508] sm:$0xf]
    %v369 = vld [vmem:[#allocation5 + $0x50c] sm:$0xf]
    %v370 = vld [vmem:[#allocation5 + $0x510] sm:$0xf]
    %v371 = vld [vmem:[#allocation5 + $0x514] sm:$0xf]
    %v372 = vld [vmem:[#allocation5 + $0x518] sm:$0xf]
    %v373 = vld [vmem:[#allocation5 + $0x51c] sm:$0xf]
    %v374 = vld [vmem:[#allocation5 + $0x520] sm:$0xf]
    %v375 = vld [vmem:[#allocation5 + $0x524] sm:$0xf]
    %v376 = vld [vmem:[#allocation5 + $0x528] sm:$0xf]
    %v377 = vld [vmem:[#allocation5 + $0x52c] sm:$0xf]
    %v378 = vld [vmem:[#allocation5 + $0x530] sm:$0xf]
    %v379 = vld [vmem:[#allocation5 + $0x534] sm:$0xf]
    %v380 = vld [vmem:[#allocation5 + $0x538] sm:$0xf]
    %v381 = vld [vmem:[#allocation5 + $0x53c] sm:$0xf]
    %v382 = vld [vmem:[#allocation5 + $0x540] sm:$0xf]
    %v383 = vld [vmem:[#allocation5 + $0x544] sm:$0xf]
    %v384 = vld [vmem:[#allocation5 + $0x548] sm:$0xf]
    %v385 = vld [vmem:[#allocation5 + $0x54c] sm:$0xf]
    %v386 = vld [vmem:[#allocation5 + $0x550] sm:$0xf]
    %v387 = vld [vmem:[#allocation5 + $0x554] sm:$0xf]
    %v388 = vld [vmem:[#allocation5 + $0x558] sm:$0xf]
    %v389 = vld [vmem:[#allocation5 + $0x55c] sm:$0xf]
    %v390 = vld [vmem:[#allocation5 + $0x560] sm:$0xf]
    %v391 = vld [vmem:[#allocation5 + $0x564] sm:$0xf]
    %v392 = vld [vmem:[#allocation5 + $0x568] sm:$0xf]
    %v393 = vld [vmem:[#allocation5 + $0x56c] sm:$0xf]
    %v394 = vld [vmem:[#allocation5 + $0x570] sm:$0xf]
    %v395 = vld [vmem:[#allocation5 + $0x574] sm:$0xf]
    %v396 = vld [vmem:[#allocation5 + $0x578] sm:$0xf]
    %v397 = vld [vmem:[#allocation5 + $0x57c] sm:$0xf]
    %v398 = vld [vmem:[#allocation5 + $0x580] sm:$0xf]
    %v399 = vld [vmem:[#allocation5 + $0x584] sm:$0xf]
    %v400 = vld [vmem:[#allocation5 + $0x588] sm:$0xf]
    %v401 = vld [vmem:[#allocation5 + $0x58c] sm:$0xf]
    %v402 = vld [vmem:[#allocation5 + $0x590] sm:$0xf]
    %v403 = vld [vmem:[#allocation5 + $0x594] sm:$0xf]
    %v404 = vld [vmem:[#allocation5 + $0x598] sm:$0xf]
    %v405 = vld [vmem:[#allocation5 + $0x59c] sm:$0xf]
    %v406 = vld [vmem:[#allocation5 + $0x5a0] sm:$0xf]
    %v407 = vld [vmem:[#allocation5 + $0x5a4] sm:$0xf]
    %v408 = vld [vmem:[#allocation5 + $0x5a8] sm:$0xf]
    %v409 = vld [vmem:[#allocation5 + $0x5ac] sm:$0xf]
    %v410 = vld [vmem:[#allocation5 + $0x5b0] sm:$0xf]
    %v411 = vld [vmem:[#allocation5 + $0x5b4] sm:$0xf]
    %v412 = vld [vmem:[#allocation5 + $0x5b8] sm:$0xf]
    %v413 = vld [vmem:[#allocation5 + $0x5bc] sm:$0xf]
    %v414 = vld [vmem:[#allocation5 + $0x5c0] sm:$0xf]
    %v415 = vld [vmem:[#allocation5 + $0x5c4] sm:$0xf]
    %v416 = vld [vmem:[#allocation5 + $0x5c8] sm:$0xf]
    %v417 = vld [vmem:[#allocation5 + $0x5cc] sm:$0xf]
    %v418 = vld [vmem:[#allocation5 + $0x5d0] sm:$0xf]
    %v419 = vld [vmem:[#allocation5 + $0x5d4] sm:$0xf]
    %v420 = vld [vmem:[#allocation5 + $0x5d8] sm:$0xf]
    %v421 = vld [vmem:[#allocation5 + $0x5dc] sm:$0xf]
    %v422 = vld [vmem:[#allocation5 + $0x5e0] sm:$0xf]
    %v423 = vld [vmem:[#allocation5 + $0x5e4] sm:$0xf]
    %v424 = vld [vmem:[#allocation5 + $0x5e8] sm:$0xf]
    %v425 = vld [vmem:[#allocation5 + $0x5ec] sm:$0xf]
    %v426 = vld [vmem:[#allocation5 + $0x5f0] sm:$0xf]
    %v427 = vld [vmem:[#allocation5 + $0x5f4] sm:$0xf]
    %v428 = vld [vmem:[#allocation5 + $0x5f8] sm:$0xf]
    %v429 = vld [vmem:[#allocation5 + $0x5fc] sm:$0xf]
    %v430 = vld [vmem:[#allocation5 + $0x600] sm:$0xf]
    %v431 = vld [vmem:[#allocation5 + $0x604] sm:$0xf]
    %v432 = vld [vmem:[#allocation5 + $0x608] sm:$0xf]
    %v433 = vld [vmem:[#allocation5 + $0x60c] sm:$0xf]
    %v434 = vld [vmem:[#allocation5 + $0x610] sm:$0xf]
    %v435 = vld [vmem:[#allocation5 + $0x614] sm:$0xf]
    %v436 = vld [vmem:[#allocation5 + $0x618] sm:$0xf]
    %v437 = vld [vmem:[#allocation5 + $0x61c] sm:$0xf]
    %v438 = vld [vmem:[#allocation5 + $0x620] sm:$0xf]
    %v439 = vld [vmem:[#allocation5 + $0x624] sm:$0xf]
    %v440 = vld [vmem:[#allocation5 + $0x628] sm:$0xf]
    %v441 = vld [vmem:[#allocation5 + $0x62c] sm:$0xf]
    %v442 = vld [vmem:[#allocation5 + $0x630] sm:$0xf]
    %v443 = vld [vmem:[#allocation5 + $0x634] sm:$0xf]
    %v444 = vld [vmem:[#allocation5 + $0x638] sm:$0xf]
    %v445 = vld [vmem:[#allocation5 + $0x63c] sm:$0xf]
    %v446 = vld [vmem:[#allocation5 + $0x640] sm:$0xf]
    %v447 = vld [vmem:[#allocation5 + $0x644] sm:$0xf]
    %v448 = vld [vmem:[#allocation5 + $0x648] sm:$0xf]
    %v449 = vld [vmem:[#allocation5 + $0x64c] sm:$0xf]
    %v450 = vld [vmem:[#allocation5 + $0x650] sm:$0xf]
    %v451 = vld [vmem:[#allocation5 + $0x654] sm:$0xf]
    %v452 = vld [vmem:[#allocation5 + $0x658] sm:$0xf]
    %v453 = vld [vmem:[#allocation5 + $0x65c] sm:$0xf]
    %v454 = vld [vmem:[#allocation5 + $0x660] sm:$0xf]
    %v455 = vld [vmem:[#allocation5 + $0x664] sm:$0xf]
    %v456 = vld [vmem:[#allocation5 + $0x668] sm:$0xf]
    %v457 = vld [vmem:[#allocation5 + $0x66c] sm:$0xf]
    %v458 = vld [vmem:[#allocation5 + $0x670] sm:$0xf]
    %v459 = vld [vmem:[#allocation5 + $0x674] sm:$0xf]
    %v460 = vld [vmem:[#allocation5 + $0x678] sm:$0xf]
    %v461 = vld [vmem:[#allocation5 + $0x67c] sm:$0xf]
    %v462 = vld [vmem:[#allocation5 + $0x680] sm:$0xf]
    %v463 = vld [vmem:[#allocation5 + $0x684] sm:$0xf]
    %v464 = vld [vmem:[#allocation5 + $0x688] sm:$0xf]
    %v465 = vld [vmem:[#allocation5 + $0x68c] sm:$0xf]
    %v466 = vld [vmem:[#allocation5 + $0x690] sm:$0xf]
    %v467 = vld [vmem:[#allocation5 + $0x694] sm:$0xf]
    %v468 = vld [vmem:[#allocation5 + $0x698] sm:$0xf]
    %v469 = vld [vmem:[#allocation5 + $0x69c] sm:$0xf]
    %v470 = vld [vmem:[#allocation5 + $0x6a0] sm:$0xf]
    %v471 = vld [vmem:[#allocation5 + $0x6a4] sm:$0xf]
    %v472 = vld [vmem:[#allocation5 + $0x6a8] sm:$0xf]
    %v473 = vld [vmem:[#allocation5 + $0x6ac] sm:$0xf]
    %v474 = vld [vmem:[#allocation5 + $0x6b0] sm:$0xf]
    %v475 = vld [vmem:[#allocation5 + $0x6b4] sm:$0xf]
    %v476 = vld [vmem:[#allocation5 + $0x6b8] sm:$0xf]
    %v477 = vld [vmem:[#allocation5 + $0x6bc] sm:$0xf]
    %v478 = vld [vmem:[#allocation5 + $0x6c0] sm:$0xf]
    %v479 = vld [vmem:[#allocation5 + $0x6c4] sm:$0xf]
    %v480 = vld [vmem:[#allocation5 + $0x6c8] sm:$0xf]
    %v481 = vld [vmem:[#allocation5 + $0x6cc] sm:$0xf]
    %v482 = vld [vmem:[#allocation5 + $0x6d0] sm:$0xf]
    %v483 = vld [vmem:[#allocation5 + $0x6d4] sm:$0xf]
    %v484 = vld [vmem:[#allocation5 + $0x6d8] sm:$0xf]
    %v485 = vld [vmem:[#allocation5 + $0x6dc] sm:$0xf]
    %v486 = vld [vmem:[#allocation5 + $0x6e0] sm:$0xf]
    %v487 = vld [vmem:[#allocation5 + $0x6e4] sm:$0xf]
    %v488 = vld [vmem:[#allocation5 + $0x6e8] sm:$0xf]
    %v489 = vld [vmem:[#allocation5 + $0x6ec] sm:$0xf]
    %v490 = vld [vmem:[#allocation5 + $0x6f0] sm:$0xf]
    %v491 = vld [vmem:[#allocation5 + $0x6f4] sm:$0xf]
    %v492 = vld [vmem:[#allocation5 + $0x6f8] sm:$0xf]
    %v493 = vld [vmem:[#allocation5 + $0x6fc] sm:$0xf]
    %v494 = vld [vmem:[#allocation5 + $0x700] sm:$0xf]
    %v495 = vld [vmem:[#allocation5 + $0x704] sm:$0xf]
    %v496 = vld [vmem:[#allocation5 + $0x708] sm:$0xf]
    %v497 = vld [vmem:[#allocation5 + $0x70c] sm:$0xf]
    %v498 = vld [vmem:[#allocation5 + $0x710] sm:$0xf]
    %v499 = vld [vmem:[#allocation5 + $0x714] sm:$0xf]
    %v500 = vld [vmem:[#allocation5 + $0x718] sm:$0xf]
    %v501 = vld [vmem:[#allocation5 + $0x71c] sm:$0xf]
    %v502 = vld [vmem:[#allocation5 + $0x720] sm:$0xf]
    %v503 = vld [vmem:[#allocation5 + $0x724] sm:$0xf]
    %v504 = vld [vmem:[#allocation5 + $0x728] sm:$0xf]
    %v505 = vld [vmem:[#allocation5 + $0x72c] sm:$0xf]
    %v506 = vld [vmem:[#allocation5 + $0x730] sm:$0xf]
    %v507 = vld [vmem:[#allocation5 + $0x734] sm:$0xf]
    %v508 = vld [vmem:[#allocation5 + $0x738] sm:$0xf]
    %v509 = vld [vmem:[#allocation5 + $0x73c] sm:$0xf]
    %v510 = vld [vmem:[#allocation5 + $0x740] sm:$0xf]
    %v511 = vld [vmem:[#allocation5 + $0x744] sm:$0xf]
    %v512 = vld [vmem:[#allocation5 + $0x748] sm:$0xf]
    %v513 = vld [vmem:[#allocation5 + $0x74c] sm:$0xf]
    %v514 = vld [vmem:[#allocation5 + $0x750] sm:$0xf]
    %v515 = vld [vmem:[#allocation5 + $0x754] sm:$0xf]
    %v516 = vld [vmem:[#allocation5 + $0x758] sm:$0xf]
    %v517 = vld [vmem:[#allocation5 + $0x75c] sm:$0xf]
    %v518 = vld [vmem:[#allocation5 + $0x760] sm:$0xf]
    %v519 = vld [vmem:[#allocation5 + $0x764] sm:$0xf]
    %v520 = vld [vmem:[#allocation5 + $0x768] sm:$0xf]
    %v521 = vld [vmem:[#allocation5 + $0x76c] sm:$0xf]
    %v522 = vld [vmem:[#allocation5 + $0x770] sm:$0xf]
    %v523 = vld [vmem:[#allocation5 + $0x774] sm:$0xf]
    %v524 = vld [vmem:[#allocation5 + $0x778] sm:$0xf]
    %v525 = vld [vmem:[#allocation5 + $0x77c] sm:$0xf]
    %v526 = vld [vmem:[#allocation5 + $0x780] sm:$0xf]
    %v527 = vld [vmem:[#allocation5 + $0x784] sm:$0xf]
    %v528 = vld [vmem:[#allocation5 + $0x788] sm:$0xf]
    %v529 = vld [vmem:[#allocation5 + $0x78c] sm:$0xf]
    %v530 = vld [vmem:[#allocation5 + $0x790] sm:$0xf]
    %v531 = vld [vmem:[#allocation5 + $0x794] sm:$0xf]
    %v532 = vld [vmem:[#allocation5 + $0x798] sm:$0xf]
    %v533 = vld [vmem:[#allocation5 + $0x79c] sm:$0xf]
    %v534 = vld [vmem:[#allocation5 + $0x7a0] sm:$0xf]
    %v535 = vld [vmem:[#allocation5 + $0x7a4] sm:$0xf]
    %v536 = vld [vmem:[#allocation5 + $0x7a8] sm:$0xf]
    %v537 = vld [vmem:[#allocation5 + $0x7ac] sm:$0xf]
    %v538 = vld [vmem:[#allocation5 + $0x7b0] sm:$0xf]
    %v539 = vld [vmem:[#allocation5 + $0x7b4] sm:$0xf]
    %v540 = vld [vmem:[#allocation5 + $0x7b8] sm:$0xf]
    %v541 = vld [vmem:[#allocation5 + $0x7bc] sm:$0xf]
    %v542 = vld [vmem:[#allocation5 + $0x7c0] sm:$0xf]
    %v543 = vld [vmem:[#allocation5 + $0x7c4] sm:$0xf]
    %v544 = vld [vmem:[#allocation5 + $0x7c8] sm:$0xf]
    %v545 = vld [vmem:[#allocation5 + $0x7cc] sm:$0xf]
    %v546 = vld [vmem:[#allocation5 + $0x7d0] sm:$0xf]
    %v547 = vld [vmem:[#allocation5 + $0x7d4] sm:$0xf]
    %v548 = vld [vmem:[#allocation5 + $0x7d8] sm:$0xf]
    %v549 = vld [vmem:[#allocation5 + $0x7dc] sm:$0xf]
    %v550 = vld [vmem:[#allocation5 + $0x7e0] sm:$0xf]
    %v551 = vld [vmem:[#allocation5 + $0x7e4] sm:$0xf]
    %v552 = vld [vmem:[#allocation5 + $0x7e8] sm:$0xf]
    %v553 = vld [vmem:[#allocation5 + $0x7ec] sm:$0xf]
    %v554 = vld [vmem:[#allocation5 + $0x7f0] sm:$0xf]
    %v555 = vld [vmem:[#allocation5 + $0x7f4] sm:$0xf]
    %v556 = vld [vmem:[#allocation5 + $0x7f8] sm:$0xf]
    %v557 = vld [vmem:[#allocation5 + $0x7fc] sm:$0xf]
    %v558 = vld [vmem:[%s2] sm:$0x1]
    %v560 = vlaneseq
    %v561 = vshrl.u32 %v560, 7
    %v562 = vsub.s32 0, %v561
    %v563 = vrot.slane %v558, %v562
    %v569 = vcombine.high %v42, %v42
    %v571 = vunpack.c.l.s4 1966171168
    %v572 = vunpack.c.0.s8 %v571
    %v573 = vlaneseq
    %v574 = vshrl.u32 %v573, 7
    %v575 = vsub.s32 %v572, %v574
    %v576 = vrot.slane %v42, %v575
    %v578 = vunpack.c.l.s4 1966171168
    %v579 = vunpack.c.0.s8 %v578
    %v580 = vlaneseq
    %v581 = vshrl.u32 %v580, 7
    %v582 = vsub.s32 %v579, %v581
    %v583 = vrot.slane %v569, %v582
    %v584 = vcombine.high %v576, %v576
    %v585 = vcombine.high %v583, %v583
    %v587 = vunpack.c.l.s4 1966171168
    %v588 = vunpack.c.0.s8 %v587
    %v589 = vlaneseq
    %v590 = vshrl.u32 %v589, 7
    %v591 = vsub.s32 %v588, %v590
    %v592 = vrot.slane %v576, %v591
    %v594 = vunpack.c.l.s4 1966171168
    %v595 = vunpack.c.0.s8 %v594
    %v596 = vlaneseq
    %v597 = vshrl.u32 %v596, 7
    %v598 = vsub.s32 %v595, %v597
    %v599 = vrot.slane %v583, %v598
    %v601 = vunpack.c.l.s4 1966171168
    %v602 = vunpack.c.0.s8 %v601
    %v603 = vlaneseq
    %v604 = vshrl.u32 %v603, 7
    %v605 = vsub.s32 %v602, %v604
    %v606 = vrot.slane %v584, %v605
    %v608 = vunpack.c.l.s4 1966171168
    %v609 = vunpack.c.0.s8 %v608
    %v610 = vlaneseq
    %v611 = vshrl.u32 %v610, 7
    %v612 = vsub.s32 %v609, %v611
    %v613 = vrot.slane %v585, %v612
    %v614 = vcombine.high %v592, %v592
    %v615 = vcombine.high %v599, %v599
    %v616 = vcombine.high %v606, %v606
    %v617 = vcombine.high %v613, %v613
    %v618 = vcombine.high %v43, %v43
    %v620 = vunpack.c.l.s4 1966171168
    %v621 = vunpack.c.0.s8 %v620
    %v622 = vlaneseq
    %v623 = vshrl.u32 %v622, 7
    %v624 = vsub.s32 %v621, %v623
    %v625 = vrot.slane %v43, %v624
    %v627 = vunpack.c.l.s4 1966171168
    %v628 = vunpack.c.0.s8 %v627
    %v629 = vlaneseq
    %v630 = vshrl.u32 %v629, 7
    %v631 = vsub.s32 %v628, %v630
    %v632 = vrot.slane %v618, %v631
    %v633 = vcombine.high %v625, %v625
    %v634 = vcombine.high %v632, %v632
    %v636 = vunpack.c.l.s4 1966171168
    %v637 = vunpack.c.0.s8 %v636
    %v638 = vlaneseq
    %v639 = vshrl.u32 %v638, 7
    %v640 = vsub.s32 %v637, %v639
    %v641 = vrot.slane %v625, %v640
    %v643 = vunpack.c.l.s4 1966171168
    %v644 = vunpack.c.0.s8 %v643
    %v645 = vlaneseq
    %v646 = vshrl.u32 %v645, 7
    %v647 = vsub.s32 %v644, %v646
    %v648 = vrot.slane %v632, %v647
    %v650 = vunpack.c.l.s4 1966171168
    %v651 = vunpack.c.0.s8 %v650
    %v652 = vlaneseq
    %v653 = vshrl.u32 %v652, 7
    %v654 = vsub.s32 %v651, %v653
    %v655 = vrot.slane %v633, %v654
    %v657 = vunpack.c.l.s4 1966171168
    %v658 = vunpack.c.0.s8 %v657
    %v659 = vlaneseq
    %v660 = vshrl.u32 %v659, 7
    %v661 = vsub.s32 %v658, %v660
    %v662 = vrot.slane %v634, %v661
    %v663 = vcombine.high %v641, %v641
    %v664 = vcombine.high %v648, %v648
    %v665 = vcombine.high %v655, %v655
    %v666 = vcombine.high %v662, %v662
    %v667 = vcombine.high %v44, %v44
    %v669 = vunpack.c.l.s4 1966171168
    %v670 = vunpack.c.0.s8 %v669
    %v671 = vlaneseq
    %v672 = vshrl.u32 %v671, 7
    %v673 = vsub.s32 %v670, %v672
    %v674 = vrot.slane %v44, %v673
    %v676 = vunpack.c.l.s4 1966171168
    %v677 = vunpack.c.0.s8 %v676
    %v678 = vlaneseq
    %v679 = vshrl.u32 %v678, 7
    %v680 = vsub.s32 %v677, %v679
    %v681 = vrot.slane %v667, %v680
    %v682 = vcombine.high %v674, %v674
    %v683 = vcombine.high %v681, %v681
    %v685 = vunpack.c.l.s4 1966171168
    %v686 = vunpack.c.0.s8 %v685
    %v687 = vlaneseq
    %v688 = vshrl.u32 %v687, 7
    %v689 = vsub.s32 %v686, %v688
    %v690 = vrot.slane %v674, %v689
    %v692 = vunpack.c.l.s4 1966171168
    %v693 = vunpack.c.0.s8 %v692
    %v694 = vlaneseq
    %v695 = vshrl.u32 %v694, 7
    %v696 = vsub.s32 %v693, %v695
    %v697 = vrot.slane %v681, %v696
    %v699 = vunpack.c.l.s4 1966171168
    %v700 = vunpack.c.0.s8 %v699
    %v701 = vlaneseq
    %v702 = vshrl.u32 %v701, 7
    %v703 = vsub.s32 %v700, %v702
    %v704 = vrot.slane %v682, %v703
    %v706 = vunpack.c.l.s4 1966171168
    %v707 = vunpack.c.0.s8 %v706
    %v708 = vlaneseq
    %v709 = vshrl.u32 %v708, 7
    %v710 = vsub.s32 %v707, %v709
    %v711 = vrot.slane %v683, %v710
    %v712 = vcombine.high %v690, %v690
    %v713 = vcombine.high %v697, %v697
    %v714 = vcombine.high %v704, %v704
    %v715 = vcombine.high %v711, %v711
    %v716 = vcombine.high %v45, %v45
    %v718 = vunpack.c.l.s4 1966171168
    %v719 = vunpack.c.0.s8 %v718
    %v720 = vlaneseq
    %v721 = vshrl.u32 %v720, 7
    %v722 = vsub.s32 %v719, %v721
    %v723 = vrot.slane %v45, %v722
    %v725 = vunpack.c.l.s4 1966171168
    %v726 = vunpack.c.0.s8 %v725
    %v727 = vlaneseq
    %v728 = vshrl.u32 %v727, 7
    %v729 = vsub.s32 %v726, %v728
    %v730 = vrot.slane %v716, %v729
    %v731 = vcombine.high %v723, %v723
    %v732 = vcombine.high %v730, %v730
    %v734 = vunpack.c.l.s4 1966171168
    %v735 = vunpack.c.0.s8 %v734
    %v736 = vlaneseq
    %v737 = vshrl.u32 %v736, 7
    %v738 = vsub.s32 %v735, %v737
    %v739 = vrot.slane %v723, %v738
    %v741 = vunpack.c.l.s4 1966171168
    %v742 = vunpack.c.0.s8 %v741
    %v743 = vlaneseq
    %v744 = vshrl.u32 %v743, 7
    %v745 = vsub.s32 %v742, %v744
    %v746 = vrot.slane %v730, %v745
    %v748 = vunpack.c.l.s4 1966171168
    %v749 = vunpack.c.0.s8 %v748
    %v750 = vlaneseq
    %v751 = vshrl.u32 %v750, 7
    %v752 = vsub.s32 %v749, %v751
    %v753 = vrot.slane %v731, %v752
    %v755 = vunpack.c.l.s4 1966171168
    %v756 = vunpack.c.0.s8 %v755
    %v757 = vlaneseq
    %v758 = vshrl.u32 %v757, 7
    %v759 = vsub.s32 %v756, %v758
    %v760 = vrot.slane %v732, %v759
    %v761 = vcombine.high %v739, %v739
    %v762 = vcombine.high %v746, %v746
    %v763 = vcombine.high %v753, %v753
    %v764 = vcombine.high %v760, %v760
    %v1309 = vunpack.c.l.b16 %v46
    %v1310 = vunpack.c.l.b16 %v47
    %v1311 = vunpack.c.l.b16 %v48
    %v1312 = vunpack.c.l.b16 %v49
    %v1313 = vunpack.c.l.b16 %v50
    %v1314 = vunpack.c.l.b16 %v51
    %v1315 = vunpack.c.l.b16 %v52
    %v1316 = vunpack.c.l.b16 %v53
    %v1317 = vunpack.c.l.b16 %v54
    %v1318 = vunpack.c.l.b16 %v55
    %v1319 = vunpack.c.l.b16 %v56
    %v1320 = vunpack.c.l.b16 %v57
    %v1321 = vunpack.c.l.b16 %v58
    %v1322 = vunpack.c.l.b16 %v59
    %v1323 = vunpack.c.l.b16 %v60
    %v1324 = vunpack.c.l.b16 %v61
    %v1325 = vunpack.c.l.b16 %v62
    %v1326 = vunpack.c.l.b16 %v63
    %v1327 = vunpack.c.l.b16 %v64
    %v1328 = vunpack.c.l.b16 %v65
    %v1329 = vunpack.c.l.b16 %v66
    %v1330 = vunpack.c.l.b16 %v67
    %v1331 = vunpack.c.l.b16 %v68
    %v1332 = vunpack.c.l.b16 %v69
    %v1333 = vunpack.c.l.b16 %v70
    %v1334 = vunpack.c.l.b16 %v71
    %v1335 = vunpack.c.l.b16 %v72
    %v1336 = vunpack.c.l.b16 %v73
    %v1337 = vunpack.c.l.b16 %v74
    %v1338 = vunpack.c.l.b16 %v75
    %v1339 = vunpack.c.l.b16 %v76
    %v1340 = vunpack.c.l.b16 %v77
    %v1341 = vunpack.c.l.b16 %v78
    %v1342 = vunpack.c.l.b16 %v79
    %v1343 = vunpack.c.l.b16 %v80
    %v1344 = vunpack.c.l.b16 %v81
    %v1345 = vunpack.c.l.b16 %v82
    %v1346 = vunpack.c.l.b16 %v83
    %v1347 = vunpack.c.l.b16 %v84
    %v1348 = vunpack.c.l.b16 %v85
    %v1349 = vunpack.c.l.b16 %v86
    %v1350 = vunpack.c.l.b16 %v87
    %v1351 = vunpack.c.l.b16 %v88
    %v1352 = vunpack.c.l.b16 %v89
    %v1353 = vunpack.c.l.b16 %v90
    %v1354 = vunpack.c.l.b16 %v91
    %v1355 = vunpack.c.l.b16 %v92
    %v1356 = vunpack.c.l.b16 %v93
    %v1357 = vunpack.c.l.b16 %v94
    %v1358 = vunpack.c.l.b16 %v95
    %v1359 = vunpack.c.l.b16 %v96
    %v1360 = vunpack.c.l.b16 %v97
    %v1361 = vunpack.c.l.b16 %v98
    %v1362 = vunpack.c.l.b16 %v99
    %v1363 = vunpack.c.l.b16 %v100
    %v1364 = vunpack.c.l.b16 %v101
    %v1365 = vunpack.c.l.b16 %v102
    %v1366 = vunpack.c.l.b16 %v103
    %v1367 = vunpack.c.l.b16 %v104
    %v1368 = vunpack.c.l.b16 %v105
    %v1369 = vunpack.c.l.b16 %v106
    %v1370 = vunpack.c.l.b16 %v107
    %v1371 = vunpack.c.l.b16 %v108
    %v1372 = vunpack.c.l.b16 %v109
    %v1373 = vunpack.c.l.b16 %v110
    %v1374 = vunpack.c.l.b16 %v111
    %v1375 = vunpack.c.l.b16 %v112
    %v1376 = vunpack.c.l.b16 %v113
    %v1377 = vunpack.c.l.b16 %v114
    %v1378 = vunpack.c.l.b16 %v115
    %v1379 = vunpack.c.l.b16 %v116
    %v1380 = vunpack.c.l.b16 %v117
    %v1381 = vunpack.c.l.b16 %v118
    %v1382 = vunpack.c.l.b16 %v119
    %v1383 = vunpack.c.l.b16 %v120
    %v1384 = vunpack.c.l.b16 %v121
    %v1385 = vunpack.c.l.b16 %v122
    %v1386 = vunpack.c.l.b16 %v123
    %v1387 = vunpack.c.l.b16 %v124
    %v1388 = vunpack.c.l.b16 %v125
    %v1389 = vunpack.c.l.b16 %v126
    %v1390 = vunpack.c.l.b16 %v127
    %v1391 = vunpack.c.l.b16 %v128
    %v1392 = vunpack.c.l.b16 %v129
    %v1393 = vunpack.c.l.b16 %v130
    %v1394 = vunpack.c.l.b16 %v131
    %v1395 = vunpack.c.l.b16 %v132
    %v1396 = vunpack.c.l.b16 %v133
    %v1397 = vunpack.c.l.b16 %v134
    %v1398 = vunpack.c.l.b16 %v135
    %v1399 = vunpack.c.l.b16 %v136
    %v1400 = vunpack.c.l.b16 %v137
    %v1401 = vunpack.c.l.b16 %v138
    %v1402 = vunpack.c.l.b16 %v139
    %v1403 = vunpack.c.l.b16 %v140
    %v1404 = vunpack.c.l.b16 %v141
    %v1405 = vunpack.c.l.b16 %v142
    %v1406 = vunpack.c.l.b16 %v143
    %v1407 = vunpack.c.l.b16 %v144
    %v1408 = vunpack.c.l.b16 %v145
    %v1409 = vunpack.c.l.b16 %v146
    %v1410 = vunpack.c.l.b16 %v147
    %v1411 = vunpack.c.l.b16 %v148
    %v1412 = vunpack.c.l.b16 %v149
    %v1413 = vunpack.c.l.b16 %v150
    %v1414 = vunpack.c.l.b16 %v151
    %v1415 = vunpack.c.l.b16 %v152
    %v1416 = vunpack.c.l.b16 %v153
    %v1417 = vunpack.c.l.b16 %v154
    %v1418 = vunpack.c.l.b16 %v155
    %v1419 = vunpack.c.l.b16 %v156
    %v1420 = vunpack.c.l.b16 %v157
    %v1421 = vunpack.c.l.b16 %v158
    %v1422 = vunpack.c.l.b16 %v159
    %v1423 = vunpack.c.l.b16 %v160
    %v1424 = vunpack.c.l.b16 %v161
    %v1425 = vunpack.c.l.b16 %v162
    %v1426 = vunpack.c.l.b16 %v163
    %v1427 = vunpack.c.l.b16 %v164
    %v1428 = vunpack.c.l.b16 %v165
    %v1429 = vunpack.c.l.b16 %v166
    %v1430 = vunpack.c.l.b16 %v167
    %v1431 = vunpack.c.l.b16 %v168
    %v1432 = vunpack.c.l.b16 %v169
    %v1433 = vunpack.c.l.b16 %v170
    %v1434 = vunpack.c.l.b16 %v171
    %v1435 = vunpack.c.l.b16 %v172
    %v1436 = vunpack.c.l.b16 %v173
    %v1437 = vunpack.c.l.b16 %v174
    %v1438 = vunpack.c.l.b16 %v175
    %v1439 = vunpack.c.l.b16 %v176
    %v1440 = vunpack.c.l.b16 %v177
    %v1441 = vunpack.c.l.b16 %v178
    %v1442 = vunpack.c.l.b16 %v179
    %v1443 = vunpack.c.l.b16 %v180
    %v1444 = vunpack.c.l.b16 %v181
    %v1445 = vunpack.c.l.b16 %v182
    %v1446 = vunpack.c.l.b16 %v183
    %v1447 = vunpack.c.l.b16 %v184
    %v1448 = vunpack.c.l.b16 %v185
    %v1449 = vunpack.c.l.b16 %v186
    %v1450 = vunpack.c.l.b16 %v187
    %v1451 = vunpack.c.l.b16 %v188
    %v1452 = vunpack.c.l.b16 %v189
    %v1453 = vunpack.c.l.b16 %v190
    %v1454 = vunpack.c.l.b16 %v191
    %v1455 = vunpack.c.l.b16 %v192
    %v1456 = vunpack.c.l.b16 %v193
    %v1457 = vunpack.c.l.b16 %v194
    %v1458 = vunpack.c.l.b16 %v195
    %v1459 = vunpack.c.l.b16 %v196
    %v1460 = vunpack.c.l.b16 %v197
    %v1461 = vunpack.c.l.b16 %v198
    %v1462 = vunpack.c.l.b16 %v199
    %v1463 = vunpack.c.l.b16 %v200
    %v1464 = vunpack.c.l.b16 %v201
    %v1465 = vunpack.c.l.b16 %v202
    %v1466 = vunpack.c.l.b16 %v203
    %v1467 = vunpack.c.l.b16 %v204
    %v1468 = vunpack.c.l.b16 %v205
    %v1469 = vunpack.c.l.b16 %v206
    %v1470 = vunpack.c.l.b16 %v207
    %v1471 = vunpack.c.l.b16 %v208
    %v1472 = vunpack.c.l.b16 %v209
    %v1473 = vunpack.c.l.b16 %v210
    %v1474 = vunpack.c.l.b16 %v211
    %v1475 = vunpack.c.l.b16 %v212
    %v1476 = vunpack.c.l.b16 %v213
    %v1477 = vunpack.c.l.b16 %v214
    %v1478 = vunpack.c.l.b16 %v215
    %v1479 = vunpack.c.l.b16 %v216
    %v1480 = vunpack.c.l.b16 %v217
    %v1481 = vunpack.c.l.b16 %v218
    %v1482 = vunpack.c.l.b16 %v219
    %v1483 = vunpack.c.l.b16 %v220
    %v1484 = vunpack.c.l.b16 %v221
    %v1485 = vunpack.c.l.b16 %v222
    %v1486 = vunpack.c.l.b16 %v223
    %v1487 = vunpack.c.l.b16 %v224
    %v1488 = vunpack.c.l.b16 %v225
    %v1489 = vunpack.c.l.b16 %v226
    %v1490 = vunpack.c.l.b16 %v227
    %v1491 = vunpack.c.l.b16 %v228
    %v1492 = vunpack.c.l.b16 %v229
    %v1493 = vunpack.c.l.b16 %v230
    %v1494 = vunpack.c.l.b16 %v231
    %v1495 = vunpack.c.l.b16 %v232
    %v1496 = vunpack.c.l.b16 %v233
    %v1497 = vunpack.c.l.b16 %v234
    %v1498 = vunpack.c.l.b16 %v235
    %v1499 = vunpack.c.l.b16 %v236
    %v1500 = vunpack.c.l.b16 %v237
    %v1501 = vunpack.c.l.b16 %v238
    %v1502 = vunpack.c.l.b16 %v239
    %v1503 = vunpack.c.l.b16 %v240
    %v1504 = vunpack.c.l.b16 %v241
    %v1505 = vunpack.c.l.b16 %v242
    %v1506 = vunpack.c.l.b16 %v243
    %v1507 = vunpack.c.l.b16 %v244
    %v1508 = vunpack.c.l.b16 %v245
    %v1509 = vunpack.c.l.b16 %v246
    %v1510 = vunpack.c.l.b16 %v247
    %v1511 = vunpack.c.l.b16 %v248
    %v1512 = vunpack.c.l.b16 %v249
    %v1513 = vunpack.c.l.b16 %v250
    %v1514 = vunpack.c.l.b16 %v251
    %v1515 = vunpack.c.l.b16 %v252
    %v1516 = vunpack.c.l.b16 %v253
    %v1517 = vunpack.c.l.b16 %v254
    %v1518 = vunpack.c.l.b16 %v255
    %v1519 = vunpack.c.l.b16 %v256
    %v1520 = vunpack.c.l.b16 %v257
    %v1521 = vunpack.c.l.b16 %v258
    %v1522 = vunpack.c.l.b16 %v259
    %v1523 = vunpack.c.l.b16 %v260
    %v1524 = vunpack.c.l.b16 %v261
    %v1525 = vunpack.c.l.b16 %v262
    %v1526 = vunpack.c.l.b16 %v263
    %v1527 = vunpack.c.l.b16 %v264
    %v1528 = vunpack.c.l.b16 %v265
    %v1529 = vunpack.c.l.b16 %v266
    %v1530 = vunpack.c.l.b16 %v267
    %v1531 = vunpack.c.l.b16 %v268
    %v1532 = vunpack.c.l.b16 %v269
    %v1533 = vunpack.c.l.b16 %v270
    %v1534 = vunpack.c.l.b16 %v271
    %v1535 = vunpack.c.l.b16 %v272
    %v1536 = vunpack.c.l.b16 %v273
    %v1537 = vunpack.c.l.b16 %v274
    %v1538 = vunpack.c.l.b16 %v275
    %v1539 = vunpack.c.l.b16 %v276
    %v1540 = vunpack.c.l.b16 %v277
    %v1541 = vunpack.c.l.b16 %v278
    %v1542 = vunpack.c.l.b16 %v279
    %v1543 = vunpack.c.l.b16 %v280
    %v1544 = vunpack.c.l.b16 %v281
    %v1545 = vunpack.c.l.b16 %v282
    %v1546 = vunpack.c.l.b16 %v283
    %v1547 = vunpack.c.l.b16 %v284
    %v1548 = vunpack.c.l.b16 %v285
    %v1549 = vunpack.c.l.b16 %v286
    %v1550 = vunpack.c.l.b16 %v287
    %v1551 = vunpack.c.l.b16 %v288
    %v1552 = vunpack.c.l.b16 %v289
    %v1553 = vunpack.c.l.b16 %v290
    %v1554 = vunpack.c.l.b16 %v291
    %v1555 = vunpack.c.l.b16 %v292
    %v1556 = vunpack.c.l.b16 %v293
    %v1557 = vunpack.c.l.b16 %v294
    %v1558 = vunpack.c.l.b16 %v295
    %v1559 = vunpack.c.l.b16 %v296
    %v1560 = vunpack.c.l.b16 %v297
    %v1561 = vunpack.c.l.b16 %v298
    %v1562 = vunpack.c.l.b16 %v299
    %v1563 = vunpack.c.l.b16 %v300
    %v1564 = vunpack.c.l.b16 %v301
    %v1565 = vunpack.c.l.b16 %v302
    %v1566 = vunpack.c.l.b16 %v303
    %v1567 = vunpack.c.l.b16 %v304
    %v1568 = vunpack.c.l.b16 %v305
    %v1569 = vunpack.c.l.b16 %v306
    %v1570 = vunpack.c.l.b16 %v307
    %v1571 = vunpack.c.l.b16 %v308
    %v1572 = vunpack.c.l.b16 %v309
    %v1573 = vunpack.c.l.b16 %v310
    %v1574 = vunpack.c.l.b16 %v311
    %v1575 = vunpack.c.l.b16 %v312
    %v1576 = vunpack.c.l.b16 %v313
    %v1577 = vunpack.c.l.b16 %v314
    %v1578 = vunpack.c.l.b16 %v315
    %v1579 = vunpack.c.l.b16 %v316
    %v1580 = vunpack.c.l.b16 %v317
    %v1581 = vunpack.c.l.b16 %v318
    %v1582 = vunpack.c.l.b16 %v319
    %v1583 = vunpack.c.l.b16 %v320
    %v1584 = vunpack.c.l.b16 %v321
    %v1585 = vunpack.c.l.b16 %v322
    %v1586 = vunpack.c.l.b16 %v323
    %v1587 = vunpack.c.l.b16 %v324
    %v1588 = vunpack.c.l.b16 %v325
    %v1589 = vunpack.c.l.b16 %v326
    %v1590 = vunpack.c.l.b16 %v327
    %v1591 = vunpack.c.l.b16 %v328
    %v1592 = vunpack.c.l.b16 %v329
    %v1593 = vunpack.c.l.b16 %v330
    %v1594 = vunpack.c.l.b16 %v331
    %v1595 = vunpack.c.l.b16 %v332
    %v1596 = vunpack.c.l.b16 %v333
    %v1597 = vunpack.c.l.b16 %v334
    %v1598 = vunpack.c.l.b16 %v335
    %v1599 = vunpack.c.l.b16 %v336
    %v1600 = vunpack.c.l.b16 %v337
    %v1601 = vunpack.c.l.b16 %v338
    %v1602 = vunpack.c.l.b16 %v339
    %v1603 = vunpack.c.l.b16 %v340
    %v1604 = vunpack.c.l.b16 %v341
    %v1605 = vunpack.c.l.b16 %v342
    %v1606 = vunpack.c.l.b16 %v343
    %v1607 = vunpack.c.l.b16 %v344
    %v1608 = vunpack.c.l.b16 %v345
    %v1609 = vunpack.c.l.b16 %v346
    %v1610 = vunpack.c.l.b16 %v347
    %v1611 = vunpack.c.l.b16 %v348
    %v1612 = vunpack.c.l.b16 %v349
    %v1613 = vunpack.c.l.b16 %v350
    %v1614 = vunpack.c.l.b16 %v351
    %v1615 = vunpack.c.l.b16 %v352
    %v1616 = vunpack.c.l.b16 %v353
    %v1617 = vunpack.c.l.b16 %v354
    %v1618 = vunpack.c.l.b16 %v355
    %v1619 = vunpack.c.l.b16 %v356
    %v1620 = vunpack.c.l.b16 %v357
    %v1621 = vunpack.c.l.b16 %v358
    %v1622 = vunpack.c.l.b16 %v359
    %v1623 = vunpack.c.l.b16 %v360
    %v1624 = vunpack.c.l.b16 %v361
    %v1625 = vunpack.c.l.b16 %v362
    %v1626 = vunpack.c.l.b16 %v363
    %v1627 = vunpack.c.l.b16 %v364
    %v1628 = vunpack.c.l.b16 %v365
    %v1629 = vunpack.c.l.b16 %v366
    %v1630 = vunpack.c.l.b16 %v367
    %v1631 = vunpack.c.l.b16 %v368
    %v1632 = vunpack.c.l.b16 %v369
    %v1633 = vunpack.c.l.b16 %v370
    %v1634 = vunpack.c.l.b16 %v371
    %v1635 = vunpack.c.l.b16 %v372
    %v1636 = vunpack.c.l.b16 %v373
    %v1637 = vunpack.c.l.b16 %v374
    %v1638 = vunpack.c.l.b16 %v375
    %v1639 = vunpack.c.l.b16 %v376
    %v1640 = vunpack.c.l.b16 %v377
    %v1641 = vunpack.c.l.b16 %v378
    %v1642 = vunpack.c.l.b16 %v379
    %v1643 = vunpack.c.l.b16 %v380
    %v1644 = vunpack.c.l.b16 %v381
    %v1645 = vunpack.c.l.b16 %v382
    %v1646 = vunpack.c.l.b16 %v383
    %v1647 = vunpack.c.l.b16 %v384
    %v1648 = vunpack.c.l.b16 %v385
    %v1649 = vunpack.c.l.b16 %v386
    %v1650 = vunpack.c.l.b16 %v387
    %v1651 = vunpack.c.l.b16 %v388
    %v1652 = vunpack.c.l.b16 %v389
    %v1653 = vunpack.c.l.b16 %v390
    %v1654 = vunpack.c.l.b16 %v391
    %v1655 = vunpack.c.l.b16 %v392
    %v1656 = vunpack.c.l.b16 %v393
    %v1657 = vunpack.c.l.b16 %v394
    %v1658 = vunpack.c.l.b16 %v395
    %v1659 = vunpack.c.l.b16 %v396
    %v1660 = vunpack.c.l.b16 %v397
    %v1661 = vunpack.c.l.b16 %v398
    %v1662 = vunpack.c.l.b16 %v399
    %v1663 = vunpack.c.l.b16 %v400
    %v1664 = vunpack.c.l.b16 %v401
    %v1665 = vunpack.c.l.b16 %v402
    %v1666 = vunpack.c.l.b16 %v403
    %v1667 = vunpack.c.l.b16 %v404
    %v1668 = vunpack.c.l.b16 %v405
    %v1669 = vunpack.c.l.b16 %v406
    %v1670 = vunpack.c.l.b16 %v407
    %v1671 = vunpack.c.l.b16 %v408
    %v1672 = vunpack.c.l.b16 %v409
    %v1673 = vunpack.c.l.b16 %v410
    %v1674 = vunpack.c.l.b16 %v411
    %v1675 = vunpack.c.l.b16 %v412
    %v1676 = vunpack.c.l.b16 %v413
    %v1677 = vunpack.c.l.b16 %v414
    %v1678 = vunpack.c.l.b16 %v415
    %v1679 = vunpack.c.l.b16 %v416
    %v1680 = vunpack.c.l.b16 %v417
    %v1681 = vunpack.c.l.b16 %v418
    %v1682 = vunpack.c.l.b16 %v419
    %v1683 = vunpack.c.l.b16 %v420
    %v1684 = vunpack.c.l.b16 %v421
    %v1685 = vunpack.c.l.b16 %v422
    %v1686 = vunpack.c.l.b16 %v423
    %v1687 = vunpack.c.l.b16 %v424
    %v1688 = vunpack.c.l.b16 %v425
    %v1689 = vunpack.c.l.b16 %v426
    %v1690 = vunpack.c.l.b16 %v427
    %v1691 = vunpack.c.l.b16 %v428
    %v1692 = vunpack.c.l.b16 %v429
    %v1693 = vunpack.c.l.b16 %v430
    %v1694 = vunpack.c.l.b16 %v431
    %v1695 = vunpack.c.l.b16 %v432
    %v1696 = vunpack.c.l.b16 %v433
    %v1697 = vunpack.c.l.b16 %v434
    %v1698 = vunpack.c.l.b16 %v435
    %v1699 = vunpack.c.l.b16 %v436
    %v1700 = vunpack.c.l.b16 %v437
    %v1701 = vunpack.c.l.b16 %v438
    %v1702 = vunpack.c.l.b16 %v439
    %v1703 = vunpack.c.l.b16 %v440
    %v1704 = vunpack.c.l.b16 %v441
    %v1705 = vunpack.c.l.b16 %v442
    %v1706 = vunpack.c.l.b16 %v443
    %v1707 = vunpack.c.l.b16 %v444
    %v1708 = vunpack.c.l.b16 %v445
    %v1709 = vunpack.c.l.b16 %v446
    %v1710 = vunpack.c.l.b16 %v447
    %v1711 = vunpack.c.l.b16 %v448
    %v1712 = vunpack.c.l.b16 %v449
    %v1713 = vunpack.c.l.b16 %v450
    %v1714 = vunpack.c.l.b16 %v451
    %v1715 = vunpack.c.l.b16 %v452
    %v1716 = vunpack.c.l.b16 %v453
    %v1717 = vunpack.c.l.b16 %v454
    %v1718 = vunpack.c.l.b16 %v455
    %v1719 = vunpack.c.l.b16 %v456
    %v1720 = vunpack.c.l.b16 %v457
    %v1721 = vunpack.c.l.b16 %v458
    %v1722 = vunpack.c.l.b16 %v459
    %v1723 = vunpack.c.l.b16 %v460
    %v1724 = vunpack.c.l.b16 %v461
    %v1725 = vunpack.c.l.b16 %v462
    %v1726 = vunpack.c.l.b16 %v463
    %v1727 = vunpack.c.l.b16 %v464
    %v1728 = vunpack.c.l.b16 %v465
    %v1729 = vunpack.c.l.b16 %v466
    %v1730 = vunpack.c.l.b16 %v467
    %v1731 = vunpack.c.l.b16 %v468
    %v1732 = vunpack.c.l.b16 %v469
    %v1733 = vunpack.c.l.b16 %v470
    %v1734 = vunpack.c.l.b16 %v471
    %v1735 = vunpack.c.l.b16 %v472
    %v1736 = vunpack.c.l.b16 %v473
    %v1737 = vunpack.c.l.b16 %v474
    %v1738 = vunpack.c.l.b16 %v475
    %v1739 = vunpack.c.l.b16 %v476
    %v1740 = vunpack.c.l.b16 %v477
    %v1741 = vunpack.c.l.b16 %v478
    %v1742 = vunpack.c.l.b16 %v479
    %v1743 = vunpack.c.l.b16 %v480
    %v1744 = vunpack.c.l.b16 %v481
    %v1745 = vunpack.c.l.b16 %v482
    %v1746 = vunpack.c.l.b16 %v483
    %v1747 = vunpack.c.l.b16 %v484
    %v1748 = vunpack.c.l.b16 %v485
    %v1749 = vunpack.c.l.b16 %v486
    %v1750 = vunpack.c.l.b16 %v487
    %v1751 = vunpack.c.l.b16 %v488
    %v1752 = vunpack.c.l.b16 %v489
    %v1753 = vunpack.c.l.b16 %v490
    %v1754 = vunpack.c.l.b16 %v491
    %v1755 = vunpack.c.l.b16 %v492
    %v1756 = vunpack.c.l.b16 %v493
    %v1757 = vunpack.c.l.b16 %v494
    %v1758 = vunpack.c.l.b16 %v495
    %v1759 = vunpack.c.l.b16 %v496
    %v1760 = vunpack.c.l.b16 %v497
    %v1761 = vunpack.c.l.b16 %v498
    %v1762 = vunpack.c.l.b16 %v499
    %v1763 = vunpack.c.l.b16 %v500
    %v1764 = vunpack.c.l.b16 %v501
    %v1765 = vunpack.c.l.b16 %v502
    %v1766 = vunpack.c.l.b16 %v503
    %v1767 = vunpack.c.l.b16 %v504
    %v1768 = vunpack.c.l.b16 %v505
    %v1769 = vunpack.c.l.b16 %v506
    %v1770 = vunpack.c.l.b16 %v507
    %v1771 = vunpack.c.l.b16 %v508
    %v1772 = vunpack.c.l.b16 %v509
    %v1773 = vunpack.c.l.b16 %v510
    %v1774 = vunpack.c.l.b16 %v511
    %v1775 = vunpack.c.l.b16 %v512
    %v1776 = vunpack.c.l.b16 %v513
    %v1777 = vunpack.c.l.b16 %v514
    %v1778 = vunpack.c.l.b16 %v515
    %v1779 = vunpack.c.l.b16 %v516
    %v1780 = vunpack.c.l.b16 %v517
    %v1781 = vunpack.c.l.b16 %v518
    %v1782 = vunpack.c.l.b16 %v519
    %v1783 = vunpack.c.l.b16 %v520
    %v1784 = vunpack.c.l.b16 %v521
    %v1785 = vunpack.c.l.b16 %v522
    %v1786 = vunpack.c.l.b16 %v523
    %v1787 = vunpack.c.l.b16 %v524
    %v1788 = vunpack.c.l.b16 %v525
    %v1789 = vunpack.c.l.b16 %v526
    %v1790 = vunpack.c.l.b16 %v527
    %v1791 = vunpack.c.l.b16 %v528
    %v1792 = vunpack.c.l.b16 %v529
    %v1793 = vunpack.c.l.b16 %v530
    %v1794 = vunpack.c.l.b16 %v531
    %v1795 = vunpack.c.l.b16 %v532
    %v1796 = vunpack.c.l.b16 %v533
    %v1797 = vunpack.c.l.b16 %v534
    %v1798 = vunpack.c.l.b16 %v535
    %v1799 = vunpack.c.l.b16 %v536
    %v1800 = vunpack.c.l.b16 %v537
    %v1801 = vunpack.c.l.b16 %v538
    %v1802 = vunpack.c.l.b16 %v539
    %v1803 = vunpack.c.l.b16 %v540
    %v1804 = vunpack.c.l.b16 %v541
    %v1805 = vunpack.c.l.b16 %v542
    %v1806 = vunpack.c.l.b16 %v543
    %v1807 = vunpack.c.l.b16 %v544
    %v1808 = vunpack.c.l.b16 %v545
    %v1809 = vunpack.c.l.b16 %v546
    %v1810 = vunpack.c.l.b16 %v547
    %v1811 = vunpack.c.l.b16 %v548
    %v1812 = vunpack.c.l.b16 %v549
    %v1813 = vunpack.c.l.b16 %v550
    %v1814 = vunpack.c.l.b16 %v551
    %v1815 = vunpack.c.l.b16 %v552
    %v1816 = vunpack.c.l.b16 %v553
    %v1817 = vunpack.c.l.b16 %v554
    %v1818 = vunpack.c.l.b16 %v555
    %v1819 = vunpack.c.l.b16 %v556
    %v1820 = vunpack.c.l.b16 %v557
    %v1821 = vpack.c.b16 %v1310, %v1309
    %v1822 = vpack.c.b16 %v1312, %v1311
    %v1823 = vpack.c.b16 %v1314, %v1313
    %v1824 = vpack.c.b16 %v1316, %v1315
    %v1825 = vpack.c.b16 %v1318, %v1317
    %v1826 = vpack.c.b16 %v1320, %v1319
    %v1827 = vpack.c.b16 %v1322, %v1321
    %v1828 = vpack.c.b16 %v1324, %v1323
    %v1829 = vpack.c.b16 %v1326, %v1325
    %v1830 = vpack.c.b16 %v1328, %v1327
    %v1831 = vpack.c.b16 %v1330, %v1329
    %v1832 = vpack.c.b16 %v1332, %v1331
    %v1833 = vpack.c.b16 %v1334, %v1333
    %v1834 = vpack.c.b16 %v1336, %v1335
    %v1835 = vpack.c.b16 %v1338, %v1337
    %v1836 = vpack.c.b16 %v1340, %v1339
    %v1837 = vpack.c.b16 %v1342, %v1341
    %v1838 = vpack.c.b16 %v1344, %v1343
    %v1839 = vpack.c.b16 %v1346, %v1345
    %v1840 = vpack.c.b16 %v1348, %v1347
    %v1841 = vpack.c.b16 %v1350, %v1349
    %v1842 = vpack.c.b16 %v1352, %v1351
    %v1843 = vpack.c.b16 %v1354, %v1353
    %v1844 = vpack.c.b16 %v1356, %v1355
    %v1845 = vpack.c.b16 %v1358, %v1357
    %v1846 = vpack.c.b16 %v1360, %v1359
    %v1847 = vpack.c.b16 %v1362, %v1361
    %v1848 = vpack.c.b16 %v1364, %v1363
    %v1849 = vpack.c.b16 %v1366, %v1365
    %v1850 = vpack.c.b16 %v1368, %v1367
    %v1851 = vpack.c.b16 %v1370, %v1369
    %v1852 = vpack.c.b16 %v1372, %v1371
    %v1853 = vpack.c.b16 %v1374, %v1373
    %v1854 = vpack.c.b16 %v1376, %v1375
    %v1855 = vpack.c.b16 %v1378, %v1377
    %v1856 = vpack.c.b16 %v1380, %v1379
    %v1857 = vpack.c.b16 %v1382, %v1381
    %v1858 = vpack.c.b16 %v1384, %v1383
    %v1859 = vpack.c.b16 %v1386, %v1385
    %v1860 = vpack.c.b16 %v1388, %v1387
    %v1861 = vpack.c.b16 %v1390, %v1389
    %v1862 = vpack.c.b16 %v1392, %v1391
    %v1863 = vpack.c.b16 %v1394, %v1393
    %v1864 = vpack.c.b16 %v1396, %v1395
    %v1865 = vpack.c.b16 %v1398, %v1397
    %v1866 = vpack.c.b16 %v1400, %v1399
    %v1867 = vpack.c.b16 %v1402, %v1401
    %v1868 = vpack.c.b16 %v1404, %v1403
    %v1869 = vpack.c.b16 %v1406, %v1405
    %v1870 = vpack.c.b16 %v1408, %v1407
    %v1871 = vpack.c.b16 %v1410, %v1409
    %v1872 = vpack.c.b16 %v1412, %v1411
    %v1873 = vpack.c.b16 %v1414, %v1413
    %v1874 = vpack.c.b16 %v1416, %v1415
    %v1875 = vpack.c.b16 %v1418, %v1417
    %v1876 = vpack.c.b16 %v1420, %v1419
    %v1877 = vpack.c.b16 %v1422, %v1421
    %v1878 = vpack.c.b16 %v1424, %v1423
    %v1879 = vpack.c.b16 %v1426, %v1425
    %v1880 = vpack.c.b16 %v1428, %v1427
    %v1881 = vpack.c.b16 %v1430, %v1429
    %v1882 = vpack.c.b16 %v1432, %v1431
    %v1883 = vpack.c.b16 %v1434, %v1433
    %v1884 = vpack.c.b16 %v1436, %v1435
    %v1885 = vpack.c.b16 %v1438, %v1437
    %v1886 = vpack.c.b16 %v1440, %v1439
    %v1887 = vpack.c.b16 %v1442, %v1441
    %v1888 = vpack.c.b16 %v1444, %v1443
    %v1889 = vpack.c.b16 %v1446, %v1445
    %v1890 = vpack.c.b16 %v1448, %v1447
    %v1891 = vpack.c.b16 %v1450, %v1449
    %v1892 = vpack.c.b16 %v1452, %v1451
    %v1893 = vpack.c.b16 %v1454, %v1453
    %v1894 = vpack.c.b16 %v1456, %v1455
    %v1895 = vpack.c.b16 %v1458, %v1457
    %v1896 = vpack.c.b16 %v1460, %v1459
    %v1897 = vpack.c.b16 %v1462, %v1461
    %v1898 = vpack.c.b16 %v1464, %v1463
    %v1899 = vpack.c.b16 %v1466, %v1465
    %v1900 = vpack.c.b16 %v1468, %v1467
    %v1901 = vpack.c.b16 %v1470, %v1469
    %v1902 = vpack.c.b16 %v1472, %v1471
    %v1903 = vpack.c.b16 %v1474, %v1473
    %v1904 = vpack.c.b16 %v1476, %v1475
    %v1905 = vpack.c.b16 %v1478, %v1477
    %v1906 = vpack.c.b16 %v1480, %v1479
    %v1907 = vpack.c.b16 %v1482, %v1481
    %v1908 = vpack.c.b16 %v1484, %v1483
    %v1909 = vpack.c.b16 %v1486, %v1485
    %v1910 = vpack.c.b16 %v1488, %v1487
    %v1911 = vpack.c.b16 %v1490, %v1489
    %v1912 = vpack.c.b16 %v1492, %v1491
    %v1913 = vpack.c.b16 %v1494, %v1493
    %v1914 = vpack.c.b16 %v1496, %v1495
    %v1915 = vpack.c.b16 %v1498, %v1497
    %v1916 = vpack.c.b16 %v1500, %v1499
    %v1917 = vpack.c.b16 %v1502, %v1501
    %v1918 = vpack.c.b16 %v1504, %v1503
    %v1919 = vpack.c.b16 %v1506, %v1505
    %v1920 = vpack.c.b16 %v1508, %v1507
    %v1921 = vpack.c.b16 %v1510, %v1509
    %v1922 = vpack.c.b16 %v1512, %v1511
    %v1923 = vpack.c.b16 %v1514, %v1513
    %v1924 = vpack.c.b16 %v1516, %v1515
    %v1925 = vpack.c.b16 %v1518, %v1517
    %v1926 = vpack.c.b16 %v1520, %v1519
    %v1927 = vpack.c.b16 %v1522, %v1521
    %v1928 = vpack.c.b16 %v1524, %v1523
    %v1929 = vpack.c.b16 %v1526, %v1525
    %v1930 = vpack.c.b16 %v1528, %v1527
    %v1931 = vpack.c.b16 %v1530, %v1529
    %v1932 = vpack.c.b16 %v1532, %v1531
    %v1933 = vpack.c.b16 %v1534, %v1533
    %v1934 = vpack.c.b16 %v1536, %v1535
    %v1935 = vpack.c.b16 %v1538, %v1537
    %v1936 = vpack.c.b16 %v1540, %v1539
    %v1937 = vpack.c.b16 %v1542, %v1541
    %v1938 = vpack.c.b16 %v1544, %v1543
    %v1939 = vpack.c.b16 %v1546, %v1545
    %v1940 = vpack.c.b16 %v1548, %v1547
    %v1941 = vpack.c.b16 %v1550, %v1549
    %v1942 = vpack.c.b16 %v1552, %v1551
    %v1943 = vpack.c.b16 %v1554, %v1553
    %v1944 = vpack.c.b16 %v1556, %v1555
    %v1945 = vpack.c.b16 %v1558, %v1557
    %v1946 = vpack.c.b16 %v1560, %v1559
    %v1947 = vpack.c.b16 %v1562, %v1561
    %v1948 = vpack.c.b16 %v1564, %v1563
    %v1949 = vpack.c.b16 %v1566, %v1565
    %v1950 = vpack.c.b16 %v1568, %v1567
    %v1951 = vpack.c.b16 %v1570, %v1569
    %v1952 = vpack.c.b16 %v1572, %v1571
    %v1953 = vpack.c.b16 %v1574, %v1573
    %v1954 = vpack.c.b16 %v1576, %v1575
    %v1955 = vpack.c.b16 %v1578, %v1577
    %v1956 = vpack.c.b16 %v1580, %v1579
    %v1957 = vpack.c.b16 %v1582, %v1581
    %v1958 = vpack.c.b16 %v1584, %v1583
    %v1959 = vpack.c.b16 %v1586, %v1585
    %v1960 = vpack.c.b16 %v1588, %v1587
    %v1961 = vpack.c.b16 %v1590, %v1589
    %v1962 = vpack.c.b16 %v1592, %v1591
    %v1963 = vpack.c.b16 %v1594, %v1593
    %v1964 = vpack.c.b16 %v1596, %v1595
    %v1965 = vpack.c.b16 %v1598, %v1597
    %v1966 = vpack.c.b16 %v1600, %v1599
    %v1967 = vpack.c.b16 %v1602, %v1601
    %v1968 = vpack.c.b16 %v1604, %v1603
    %v1969 = vpack.c.b16 %v1606, %v1605
    %v1970 = vpack.c.b16 %v1608, %v1607
    %v1971 = vpack.c.b16 %v1610, %v1609
    %v1972 = vpack.c.b16 %v1612, %v1611
    %v1973 = vpack.c.b16 %v1614, %v1613
    %v1974 = vpack.c.b16 %v1616, %v1615
    %v1975 = vpack.c.b16 %v1618, %v1617
    %v1976 = vpack.c.b16 %v1620, %v1619
    %v1977 = vpack.c.b16 %v1622, %v1621
    %v1978 = vpack.c.b16 %v1624, %v1623
    %v1979 = vpack.c.b16 %v1626, %v1625
    %v1980 = vpack.c.b16 %v1628, %v1627
    %v1981 = vpack.c.b16 %v1630, %v1629
    %v1982 = vpack.c.b16 %v1632, %v1631
    %v1983 = vpack.c.b16 %v1634, %v1633
    %v1984 = vpack.c.b16 %v1636, %v1635
    %v1985 = vpack.c.b16 %v1638, %v1637
    %v1986 = vpack.c.b16 %v1640, %v1639
    %v1987 = vpack.c.b16 %v1642, %v1641
    %v1988 = vpack.c.b16 %v1644, %v1643
    %v1989 = vpack.c.b16 %v1646, %v1645
    %v1990 = vpack.c.b16 %v1648, %v1647
    %v1991 = vpack.c.b16 %v1650, %v1649
    %v1992 = vpack.c.b16 %v1652, %v1651
    %v1993 = vpack.c.b16 %v1654, %v1653
    %v1994 = vpack.c.b16 %v1656, %v1655
    %v1995 = vpack.c.b16 %v1658, %v1657
    %v1996 = vpack.c.b16 %v1660, %v1659
    %v1997 = vpack.c.b16 %v1662, %v1661
    %v1998 = vpack.c.b16 %v1664, %v1663
    %v1999 = vpack.c.b16 %v1666, %v1665
    %v2000 = vpack.c.b16 %v1668, %v1667
    %v2001 = vpack.c.b16 %v1670, %v1669
    %v2002 = vpack.c.b16 %v1672, %v1671
    %v2003 = vpack.c.b16 %v1674, %v1673
    %v2004 = vpack.c.b16 %v1676, %v1675
    %v2005 = vpack.c.b16 %v1678, %v1677
    %v2006 = vpack.c.b16 %v1680, %v1679
    %v2007 = vpack.c.b16 %v1682, %v1681
    %v2008 = vpack.c.b16 %v1684, %v1683
    %v2009 = vpack.c.b16 %v1686, %v1685
    %v2010 = vpack.c.b16 %v1688, %v1687
    %v2011 = vpack.c.b16 %v1690, %v1689
    %v2012 = vpack.c.b16 %v1692, %v1691
    %v2013 = vpack.c.b16 %v1694, %v1693
    %v2014 = vpack.c.b16 %v1696, %v1695
    %v2015 = vpack.c.b16 %v1698, %v1697
    %v2016 = vpack.c.b16 %v1700, %v1699
    %v2017 = vpack.c.b16 %v1702, %v1701
    %v2018 = vpack.c.b16 %v1704, %v1703
    %v2019 = vpack.c.b16 %v1706, %v1705
    %v2020 = vpack.c.b16 %v1708, %v1707
    %v2021 = vpack.c.b16 %v1710, %v1709
    %v2022 = vpack.c.b16 %v1712, %v1711
    %v2023 = vpack.c.b16 %v1714, %v1713
    %v2024 = vpack.c.b16 %v1716, %v1715
    %v2025 = vpack.c.b16 %v1718, %v1717
    %v2026 = vpack.c.b16 %v1720, %v1719
    %v2027 = vpack.c.b16 %v1722, %v1721
    %v2028 = vpack.c.b16 %v1724, %v1723
    %v2029 = vpack.c.b16 %v1726, %v1725
    %v2030 = vpack.c.b16 %v1728, %v1727
    %v2031 = vpack.c.b16 %v1730, %v1729
    %v2032 = vpack.c.b16 %v1732, %v1731
    %v2033 = vpack.c.b16 %v1734, %v1733
    %v2034 = vpack.c.b16 %v1736, %v1735
    %v2035 = vpack.c.b16 %v1738, %v1737
    %v2036 = vpack.c.b16 %v1740, %v1739
    %v2037 = vpack.c.b16 %v1742, %v1741
    %v2038 = vpack.c.b16 %v1744, %v1743
    %v2039 = vpack.c.b16 %v1746, %v1745
    %v2040 = vpack.c.b16 %v1748, %v1747
    %v2041 = vpack.c.b16 %v1750, %v1749
    %v2042 = vpack.c.b16 %v1752, %v1751
    %v2043 = vpack.c.b16 %v1754, %v1753
    %v2044 = vpack.c.b16 %v1756, %v1755
    %v2045 = vpack.c.b16 %v1758, %v1757
    %v2046 = vpack.c.b16 %v1760, %v1759
    %v2047 = vpack.c.b16 %v1762, %v1761
    %v2048 = vpack.c.b16 %v1764, %v1763
    %v2049 = vpack.c.b16 %v1766, %v1765
    %v2050 = vpack.c.b16 %v1768, %v1767
    %v2051 = vpack.c.b16 %v1770, %v1769
    %v2052 = vpack.c.b16 %v1772, %v1771
    %v2053 = vpack.c.b16 %v1774, %v1773
    %v2054 = vpack.c.b16 %v1776, %v1775
    %v2055 = vpack.c.b16 %v1778, %v1777
    %v2056 = vpack.c.b16 %v1780, %v1779
    %v2057 = vpack.c.b16 %v1782, %v1781
    %v2058 = vpack.c.b16 %v1784, %v1783
    %v2059 = vpack.c.b16 %v1786, %v1785
    %v2060 = vpack.c.b16 %v1788, %v1787
    %v2061 = vpack.c.b16 %v1790, %v1789
    %v2062 = vpack.c.b16 %v1792, %v1791
    %v2063 = vpack.c.b16 %v1794, %v1793
    %v2064 = vpack.c.b16 %v1796, %v1795
    %v2065 = vpack.c.b16 %v1798, %v1797
    %v2066 = vpack.c.b16 %v1800, %v1799
    %v2067 = vpack.c.b16 %v1802, %v1801
    %v2068 = vpack.c.b16 %v1804, %v1803
    %v2069 = vpack.c.b16 %v1806, %v1805
    %v2070 = vpack.c.b16 %v1808, %v1807
    %v2071 = vpack.c.b16 %v1810, %v1809
    %v2072 = vpack.c.b16 %v1812, %v1811
    %v2073 = vpack.c.b16 %v1814, %v1813
    %v2074 = vpack.c.b16 %v1816, %v1815
    %v2075 = vpack.c.b16 %v1818, %v1817
    %v2076 = vpack.c.b16 %v1820, %v1819
    %2333 = vmatprep.subr.bf16.mxu0 0
    %2334 = vmatpush1.bf16.msra.mxu0 %v1821
    %2335 = vmatprep.subr.bf16.mxu0 0
    %2336 = vmatpush1.bf16.msra.mxu0 %v1822
    %2337 = vmatprep.subr.bf16.mxu0 0
    %2338 = vmatpush1.bf16.msra.mxu0 %v1823
    %2339 = vmatprep.subr.bf16.mxu0 0
    %2340 = vmatpush1.bf16.msra.mxu0 %v1824
    %2341 = vmatprep.subr.bf16.mxu0 0
    %2342 = vmatpush1.bf16.msra.mxu0 %v1825
    %2343 = vmatprep.subr.bf16.mxu0 0
    %2344 = vmatpush1.bf16.msra.mxu0 %v1826
    %2345 = vmatprep.subr.bf16.mxu0 0
    %2346 = vmatpush1.bf16.msra.mxu0 %v1827
    %2347 = vmatprep.subr.bf16.mxu0 0
    %2348 = vmatpush1.bf16.msra.mxu0 %v1828
    %2349 = vmatprep.subr.bf16.mxu0 0
    %2350 = vmatpush1.bf16.msra.mxu0 %v1829
    %2351 = vmatprep.subr.bf16.mxu0 0
    %2352 = vmatpush1.bf16.msra.mxu0 %v1830
    %2353 = vmatprep.subr.bf16.mxu0 0
    %2354 = vmatpush1.bf16.msra.mxu0 %v1831
    %2355 = vmatprep.subr.bf16.mxu0 0
    %2356 = vmatpush1.bf16.msra.mxu0 %v1832
    %2357 = vmatprep.subr.bf16.mxu0 0
    %2358 = vmatpush1.bf16.msra.mxu0 %v1833
    %2359 = vmatprep.subr.bf16.mxu0 0
    %2360 = vmatpush1.bf16.msra.mxu0 %v1834
    %2361 = vmatprep.subr.bf16.mxu0 0
    %2362 = vmatpush1.bf16.msra.mxu0 %v1835
    %2363 = vmatprep.subr.bf16.mxu0 0
    %2364 = vmatpush1.bf16.msra.mxu0 %v1836
    %2365 = vmatprep.mubr.bf16.mxu0 %v606
    %2366 = vmatmul.mubr.bf16.gmra.mrb[0].mxu0 %v592
    %v2367 = vpop.f32.mrb[0].mxu0
    %v2368 = vadd.f32 %v563, %v2367
    %v2369 = vpop.f32.mrb[0].mxu0
    %v2370 = vpop.f32.mrb[0].mxu0
    %v2371 = vpop.f32.mrb[0].mxu0
    %2372 = vdwg.mxu0
    %2373 = vmatprep.subr.bf16.mxu0 0
    %2374 = vmatpush1.bf16.msra.mxu0 %v1837
    %2375 = vmatprep.subr.bf16.mxu0 0
    %2376 = vmatpush1.bf16.msra.mxu0 %v1838
    %2377 = vmatprep.subr.bf16.mxu0 0
    %2378 = vmatpush1.bf16.msra.mxu0 %v1839
    %2379 = vmatprep.subr.bf16.mxu0 0
    %2380 = vmatpush1.bf16.msra.mxu0 %v1840
    %2381 = vmatprep.subr.bf16.mxu0 0
    %2382 = vmatpush1.bf16.msra.mxu0 %v1841
    %2383 = vmatprep.subr.bf16.mxu0 0
    %2384 = vmatpush1.bf16.msra.mxu0 %v1842
    %2385 = vmatprep.subr.bf16.mxu0 0
    %2386 = vmatpush1.bf16.msra.mxu0 %v1843
    %2387 = vmatprep.subr.bf16.mxu0 0
    %2388 = vmatpush1.bf16.msra.mxu0 %v1844
    %2389 = vmatprep.subr.bf16.mxu0 0
    %2390 = vmatpush1.bf16.msra.mxu0 %v1845
    %2391 = vmatprep.subr.bf16.mxu0 0
    %2392 = vmatpush1.bf16.msra.mxu0 %v1846
    %2393 = vmatprep.subr.bf16.mxu0 0
    %2394 = vmatpush1.bf16.msra.mxu0 %v1847
    %2395 = vmatprep.subr.bf16.mxu0 0
    %2396 = vmatpush1.bf16.msra.mxu0 %v1848
    %2397 = vmatprep.subr.bf16.mxu0 0
    %2398 = vmatpush1.bf16.msra.mxu0 %v1849
    %2399 = vmatprep.subr.bf16.mxu0 0
    %2400 = vmatpush1.bf16.msra.mxu0 %v1850
    %2401 = vmatprep.subr.bf16.mxu0 0
    %2402 = vmatpush1.bf16.msra.mxu0 %v1851
    %2403 = vmatprep.subr.bf16.mxu0 0
    %2404 = vmatpush1.bf16.msra.mxu0 %v1852
    %2405 = vmatprep.mubr.bf16.mxu0 %v616
    %2406 = vmatmul.mubr.bf16.gmra.mrb[0].mxu0 %v614
    %v2407 = vpop.f32.mrb[0].mxu0
    %v2408 = vadd.f32 %v2368, %v2407
    %v2409 = vpop.f32.mrb[0].mxu0
    %v2410 = vpop.f32.mrb[0].mxu0
    %v2411 = vpop.f32.mrb[0].mxu0
    %2412 = vdwg.mxu0
    %2413 = vmatprep.subr.bf16.mxu0 0
    %2414 = vmatpush1.bf16.msra.mxu0 %v1853
    %2415 = vmatprep.subr.bf16.mxu0 0
    %2416 = vmatpush1.bf16.msra.mxu0 %v1854
    %2417 = vmatprep.subr.bf16.mxu0 0
    %2418 = vmatpush1.bf16.msra.mxu0 %v1855
    %2419 = vmatprep.subr.bf16.mxu0 0
    %2420 = vmatpush1.bf16.msra.mxu0 %v1856
    %2421 = vmatprep.subr.bf16.mxu0 0
    %2422 = vmatpush1.bf16.msra.mxu0 %v1857
    %2423 = vmatprep.subr.bf16.mxu0 0
    %2424 = vmatpush1.bf16.msra.mxu0 %v1858
    %2425 = vmatprep.subr.bf16.mxu0 0
    %2426 = vmatpush1.bf16.msra.mxu0 %v1859
    %2427 = vmatprep.subr.bf16.mxu0 0
    %2428 = vmatpush1.bf16.msra.mxu0 %v1860
    %2429 = vmatprep.subr.bf16.mxu0 0
    %2430 = vmatpush1.bf16.msra.mxu0 %v1861
    %2431 = vmatprep.subr.bf16.mxu0 0
    %2432 = vmatpush1.bf16.msra.mxu0 %v1862
    %2433 = vmatprep.subr.bf16.mxu0 0
    %2434 = vmatpush1.bf16.msra.mxu0 %v1863
    %2435 = vmatprep.subr.bf16.mxu0 0
    %2436 = vmatpush1.bf16.msra.mxu0 %v1864
    %2437 = vmatprep.subr.bf16.mxu0 0
    %2438 = vmatpush1.bf16.msra.mxu0 %v1865
    %2439 = vmatprep.subr.bf16.mxu0 0
    %2440 = vmatpush1.bf16.msra.mxu0 %v1866
    %2441 = vmatprep.subr.bf16.mxu0 0
    %2442 = vmatpush1.bf16.msra.mxu0 %v1867
    %2443 = vmatprep.subr.bf16.mxu0 0
    %2444 = vmatpush1.bf16.msra.mxu0 %v1868
    %2445 = vmatprep.mubr.bf16.mxu0 %v613
    %2446 = vmatmul.mubr.bf16.gmra.mrb[0].mxu0 %v599
    %v2447 = vpop.f32.mrb[0].mxu0
    %v2448 = vadd.f32 %v2408, %v2447
    %v2449 = vpop.f32.mrb[0].mxu0
    %v2450 = vpop.f32.mrb[0].mxu0
    %v2451 = vpop.f32.mrb[0].mxu0
    %2452 = vdwg.mxu0
    %2453 = vmatprep.subr.bf16.mxu0 0
    %2454 = vmatpush1.bf16.msra.mxu0 %v1869
    %2455 = vmatprep.subr.bf16.mxu0 0
    %2456 = vmatpush1.bf16.msra.mxu0 %v1870
    %2457 = vmatprep.subr.bf16.mxu0 0
    %2458 = vmatpush1.bf16.msra.mxu0 %v1871
    %2459 = vmatprep.subr.bf16.mxu0 0
    %2460 = vmatpush1.bf16.msra.mxu0 %v1872
    %2461 = vmatprep.subr.bf16.mxu0 0
    %2462 = vmatpush1.bf16.msra.mxu0 %v1873
    %2463 = vmatprep.subr.bf16.mxu0 0
    %2464 = vmatpush1.bf16.msra.mxu0 %v1874
    %2465 = vmatprep.subr.bf16.mxu0 0
    %2466 = vmatpush1.bf16.msra.mxu0 %v1875
    %2467 = vmatprep.subr.bf16.mxu0 0
    %2468 = vmatpush1.bf16.msra.mxu0 %v1876
    %2469 = vmatprep.subr.bf16.mxu0 0
    %2470 = vmatpush1.bf16.msra.mxu0 %v1877
    %2471 = vmatprep.subr.bf16.mxu0 0
    %2472 = vmatpush1.bf16.msra.mxu0 %v1878
    %2473 = vmatprep.subr.bf16.mxu0 0
    %2474 = vmatpush1.bf16.msra.mxu0 %v1879
    %2475 = vmatprep.subr.bf16.mxu0 0
    %2476 = vmatpush1.bf16.msra.mxu0 %v1880
    %2477 = vmatprep.subr.bf16.mxu0 0
    %2478 = vmatpush1.bf16.msra.mxu0 %v1881
    %2479 = vmatprep.subr.bf16.mxu0 0
    %2480 = vmatpush1.bf16.msra.mxu0 %v1882
    %2481 = vmatprep.subr.bf16.mxu0 0
    %2482 = vmatpush1.bf16.msra.mxu0 %v1883
    %2483 = vmatprep.subr.bf16.mxu0 0
    %2484 = vmatpush1.bf16.msra.mxu0 %v1884
    %2485 = vmatprep.mubr.bf16.mxu0 %v617
    %2486 = vmatmul.mubr.bf16.gmra.mrb[0].mxu0 %v615
    %v2487 = vpop.f32.mrb[0].mxu0
    %v2488 = vadd.f32 %v2448, %v2487
    %v2489 = vpop.f32.mrb[0].mxu0
    %v2490 = vpop.f32.mrb[0].mxu0
    %v2491 = vpop.f32.mrb[0].mxu0
    %2492 = vdwg.mxu0
    %2493 = vmatprep.subr.bf16.mxu0 0
    %2494 = vmatpush1.bf16.msra.mxu0 %v1885
    %2495 = vmatprep.subr.bf16.mxu0 0
    %2496 = vmatpush1.bf16.msra.mxu0 %v1886
    %2497 = vmatprep.subr.bf16.mxu0 0
    %2498 = vmatpush1.bf16.msra.mxu0 %v1887
    %2499 = vmatprep.subr.bf16.mxu0 0
    %2500 = vmatpush1.bf16.msra.mxu0 %v1888
    %2501 = vmatprep.subr.bf16.mxu0 0
    %2502 = vmatpush1.bf16.msra.mxu0 %v1889
    %2503 = vmatprep.subr.bf16.mxu0 0
    %2504 = vmatpush1.bf16.msra.mxu0 %v1890
    %2505 = vmatprep.subr.bf16.mxu0 0
    %2506 = vmatpush1.bf16.msra.mxu0 %v1891
    %2507 = vmatprep.subr.bf16.mxu0 0
    %2508 = vmatpush1.bf16.msra.mxu0 %v1892
    %2509 = vmatprep.subr.bf16.mxu0 0
    %2510 = vmatpush1.bf16.msra.mxu0 %v1893
    %2511 = vmatprep.subr.bf16.mxu0 0
    %2512 = vmatpush1.bf16.msra.mxu0 %v1894
    %2513 = vmatprep.subr.bf16.mxu0 0
    %2514 = vmatpush1.bf16.msra.mxu0 %v1895
    %2515 = vmatprep.subr.bf16.mxu0 0
    %2516 = vmatpush1.bf16.msra.mxu0 %v1896
    %2517 = vmatprep.subr.bf16.mxu0 0
    %2518 = vmatpush1.bf16.msra.mxu0 %v1897
    %2519 = vmatprep.subr.bf16.mxu0 0
    %2520 = vmatpush1.bf16.msra.mxu0 %v1898
    %2521 = vmatprep.subr.bf16.mxu0 0
    %2522 = vmatpush1.bf16.msra.mxu0 %v1899
    %2523 = vmatprep.subr.bf16.mxu0 0
    %2524 = vmatpush1.bf16.msra.mxu0 %v1900
    %2525 = vmatprep.mubr.bf16.mxu0 %v655
    %2526 = vmatmul.mubr.bf16.gmra.mrb[0].mxu0 %v641
    %v2527 = vpop.f32.mrb[0].mxu0
    %v2528 = vadd.f32 %v2488, %v2527
    %v2529 = vpop.f32.mrb[0].mxu0
    %v2530 = vpop.f32.mrb[0].mxu0
    %v2531 = vpop.f32.mrb[0].mxu0
    %2532 = vdwg.mxu0
    %2533 = vmatprep.subr.bf16.mxu0 0
    %2534 = vmatpush1.bf16.msra.mxu0 %v1901
    %2535 = vmatprep.subr.bf16.mxu0 0
    %2536 = vmatpush1.bf16.msra.mxu0 %v1902
    %2537 = vmatprep.subr.bf16.mxu0 0
    %2538 = vmatpush1.bf16.msra.mxu0 %v1903
    %2539 = vmatprep.subr.bf16.mxu0 0
    %2540 = vmatpush1.bf16.msra.mxu0 %v1904
    %2541 = vmatprep.subr.bf16.mxu0 0
    %2542 = vmatpush1.bf16.msra.mxu0 %v1905
    %2543 = vmatprep.subr.bf16.mxu0 0
    %2544 = vmatpush1.bf16.msra.mxu0 %v1906
    %2545 = vmatprep.subr.bf16.mxu0 0
    %2546 = vmatpush1.bf16.msra.mxu0 %v1907
    %2547 = vmatprep.subr.bf16.mxu0 0
    %2548 = vmatpush1.bf16.msra.mxu0 %v1908
    %2549 = vmatprep.subr.bf16.mxu0 0
    %2550 = vmatpush1.bf16.msra.mxu0 %v1909
    %2551 = vmatprep.subr.bf16.mxu0 0
    %2552 = vmatpush1.bf16.msra.mxu0 %v1910
    %2553 = vmatprep.subr.bf16.mxu0 0
    %2554 = vmatpush1.bf16.msra.mxu0 %v1911
    %2555 = vmatprep.subr.bf16.mxu0 0
    %2556 = vmatpush1.bf16.msra.mxu0 %v1912
    %2557 = vmatprep.subr.bf16.mxu0 0
    %2558 = vmatpush1.bf16.msra.mxu0 %v1913
    %2559 = vmatprep.subr.bf16.mxu0 0
    %2560 = vmatpush1.bf16.msra.mxu0 %v1914
    %2561 = vmatprep.subr.bf16.mxu0 0
    %2562 = vmatpush1.bf16.msra.mxu0 %v1915
    %2563 = vmatprep.subr.bf16.mxu0 0
    %2564 = vmatpush1.bf16.msra.mxu0 %v1916
    %2565 = vmatprep.mubr.bf16.mxu0 %v665
    %2566 = vmatmul.mubr.bf16.gmra.mrb[0].mxu0 %v663
    %v2567 = vpop.f32.mrb[0].mxu0
    %v2568 = vadd.f32 %v2528, %v2567
    %v2569 = vpop.f32.mrb[0].mxu0
    %v2570 = vpop.f32.mrb[0].mxu0
    %v2571 = vpop.f32.mrb[0].mxu0
    %2572 = vdwg.mxu0
    %2573 = vmatprep.subr.bf16.mxu0 0
    %2574 = vmatpush1.bf16.msra.mxu0 %v1917
    %2575 = vmatprep.subr.bf16.mxu0 0
    %2576 = vmatpush1.bf16.msra.mxu0 %v1918
    %2577 = vmatprep.subr.bf16.mxu0 0
    %2578 = vmatpush1.bf16.msra.mxu0 %v1919
    %2579 = vmatprep.subr.bf16.mxu0 0
    %2580 = vmatpush1.bf16.msra.mxu0 %v1920
    %2581 = vmatprep.subr.bf16.mxu0 0
    %2582 = vmatpush1.bf16.msra.mxu0 %v1921
    %2583 = vmatprep.subr.bf16.mxu0 0
    %2584 = vmatpush1.bf16.msra.mxu0 %v1922
    %2585 = vmatprep.subr.bf16.mxu0 0
    %2586 = vmatpush1.bf16.msra.mxu0 %v1923
    %2587 = vmatprep.subr.bf16.mxu0 0
    %2588 = vmatpush1.bf16.msra.mxu0 %v1924
    %2589 = vmatprep.subr.bf16.mxu0 0
    %2590 = vmatpush1.bf16.msra.mxu0 %v1925
    %2591 = vmatprep.subr.bf16.mxu0 0
    %2592 = vmatpush1.bf16.msra.mxu0 %v1926
    %2593 = vmatprep.subr.bf16.mxu0 0
    %2594 = vmatpush1.bf16.msra.mxu0 %v1927
    %2595 = vmatprep.subr.bf16.mxu0 0
    %2596 = vmatpush1.bf16.msra.mxu0 %v1928
    %2597 = vmatprep.subr.bf16.mxu0 0
    %2598 = vmatpush1.bf16.msra.mxu0 %v1929
    %2599 = vmatprep.subr.bf16.mxu0 0
    %2600 = vmatpush1.bf16.msra.mxu0 %v1930
    %2601 = vmatprep.subr.bf16.mxu0 0
    %2602 = vmatpush1.bf16.msra.mxu0 %v1931
    %2603 = vmatprep.subr.bf16.mxu0 0
    %2604 = vmatpush1.bf16.msra.mxu0 %v1932
    %2605 = vmatprep.mubr.bf16.mxu0 %v662
    %2606 = vmatmul.mubr.bf16.gmra.mrb[0].mxu0 %v648
    %v2607 = vpop.f32.mrb[0].mxu0
    %v2608 = vadd.f32 %v2568, %v2607
    %v2609 = vpop.f32.mrb[0].mxu0
    %v2610 = vpop.f32.mrb[0].mxu0
    %v2611 = vpop.f32.mrb[0].mxu0
    %2612 = vdwg.mxu0
    %2613 = vmatprep.subr.bf16.mxu0 0
    %2614 = vmatpush1.bf16.msra.mxu0 %v1933
    %2615 = vmatprep.subr.bf16.mxu0 0
    %2616 = vmatpush1.bf16.msra.mxu0 %v1934
    %2617 = vmatprep.subr.bf16.mxu0 0
    %2618 = vmatpush1.bf16.msra.mxu0 %v1935
    %2619 = vmatprep.subr.bf16.mxu0 0
    %2620 = vmatpush1.bf16.msra.mxu0 %v1936
    %2621 = vmatprep.subr.bf16.mxu0 0
    %2622 = vmatpush1.bf16.msra.mxu0 %v1937
    %2623 = vmatprep.subr.bf16.mxu0 0
    %2624 = vmatpush1.bf16.msra.mxu0 %v1938
    %2625 = vmatprep.subr.bf16.mxu0 0
    %2626 = vmatpush1.bf16.msra.mxu0 %v1939
    %2627 = vmatprep.subr.bf16.mxu0 0
    %2628 = vmatpush1.bf16.msra.mxu0 %v1940
    %2629 = vmatprep.subr.bf16.mxu0 0
    %2630 = vmatpush1.bf16.msra.mxu0 %v1941
    %2631 = vmatprep.subr.bf16.mxu0 0
    %2632 = vmatpush1.bf16.msra.mxu0 %v1942
    %2633 = vmatprep.subr.bf16.mxu0 0
    %2634 = vmatpush1.bf16.msra.mxu0 %v1943
    %2635 = vmatprep.subr.bf16.mxu0 0
    %2636 = vmatpush1.bf16.msra.mxu0 %v1944
    %2637 = vmatprep.subr.bf16.mxu0 0
    %2638 = vmatpush1.bf16.msra.mxu0 %v1945
    %2639 = vmatprep.subr.bf16.mxu0 0
    %2640 = vmatpush1.bf16.msra.mxu0 %v1946
    %2641 = vmatprep.subr.bf16.mxu0 0
    %2642 = vmatpush1.bf16.msra.mxu0 %v1947
    %2643 = vmatprep.subr.bf16.mxu0 0
    %2644 = vmatpush1.bf16.msra.mxu0 %v1948
    %2645 = vmatprep.mubr.bf16.mxu0 %v666
    %2646 = vmatmul.mubr.bf16.gmra.mrb[0].mxu0 %v664
    %v2647 = vpop.f32.mrb[0].mxu0
    %v2648 = vadd.f32 %v2608, %v2647
    %v2649 = vpop.f32.mrb[0].mxu0
    %v2650 = vpop.f32.mrb[0].mxu0
    %v2651 = vpop.f32.mrb[0].mxu0
    %2652 = vdwg.mxu0
    %2653 = vmatprep.subr.bf16.mxu0 0
    %2654 = vmatpush1.bf16.msra.mxu0 %v1949
    %2655 = vmatprep.subr.bf16.mxu0 0
    %2656 = vmatpush1.bf16.msra.mxu0 %v1950
    %2657 = vmatprep.subr.bf16.mxu0 0
    %2658 = vmatpush1.bf16.msra.mxu0 %v1951
    %2659 = vmatprep.subr.bf16.mxu0 0
    %2660 = vmatpush1.bf16.msra.mxu0 %v1952
    %2661 = vmatprep.subr.bf16.mxu0 0
    %2662 = vmatpush1.bf16.msra.mxu0 %v1953
    %2663 = vmatprep.subr.bf16.mxu0 0
    %2664 = vmatpush1.bf16.msra.mxu0 %v1954
    %2665 = vmatprep.subr.bf16.mxu0 0
    %2666 = vmatpush1.bf16.msra.mxu0 %v1955
    %2667 = vmatprep.subr.bf16.mxu0 0
    %2668 = vmatpush1.bf16.msra.mxu0 %v1956
    %2669 = vmatprep.subr.bf16.mxu0 0
    %2670 = vmatpush1.bf16.msra.mxu0 %v1957
    %2671 = vmatprep.subr.bf16.mxu0 0
    %2672 = vmatpush1.bf16.msra.mxu0 %v1958
    %2673 = vmatprep.subr.bf16.mxu0 0
    %2674 = vmatpush1.bf16.msra.mxu0 %v1959
    %2675 = vmatprep.subr.bf16.mxu0 0
    %2676 = vmatpush1.bf16.msra.mxu0 %v1960
    %2677 = vmatprep.subr.bf16.mxu0 0
    %2678 = vmatpush1.bf16.msra.mxu0 %v1961
    %2679 = vmatprep.subr.bf16.mxu0 0
    %2680 = vmatpush1.bf16.msra.mxu0 %v1962
    %2681 = vmatprep.subr.bf16.mxu0 0
    %2682 = vmatpush1.bf16.msra.mxu0 %v1963
    %2683 = vmatprep.subr.bf16.mxu0 0
    %2684 = vmatpush1.bf16.msra.mxu0 %v1964
    %2685 = vmatprep.mubr.bf16.mxu0 %v704
    %2686 = vmatmul.mubr.bf16.gmra.mrb[0].mxu0 %v690
    %v2687 = vpop.f32.mrb[0].mxu0
    %v2688 = vadd.f32 %v2648, %v2687
    %v2689 = vpop.f32.mrb[0].mxu0
    %v2690 = vpop.f32.mrb[0].mxu0
    %v2691 = vpop.f32.mrb[0].mxu0
    %2692 = vdwg.mxu0
    %2693 = vmatprep.subr.bf16.mxu0 0
    %2694 = vmatpush1.bf16.msra.mxu0 %v1965
    %2695 = vmatprep.subr.bf16.mxu0 0
    %2696 = vmatpush1.bf16.msra.mxu0 %v1966
    %2697 = vmatprep.subr.bf16.mxu0 0
    %2698 = vmatpush1.bf16.msra.mxu0 %v1967
    %2699 = vmatprep.subr.bf16.mxu0 0
    %2700 = vmatpush1.bf16.msra.mxu0 %v1968
    %2701 = vmatprep.subr.bf16.mxu0 0
    %2702 = vmatpush1.bf16.msra.mxu0 %v1969
    %2703 = vmatprep.subr.bf16.mxu0 0
    %2704 = vmatpush1.bf16.msra.mxu0 %v1970
    %2705 = vmatprep.subr.bf16.mxu0 0
    %2706 = vmatpush1.bf16.msra.mxu0 %v1971
    %2707 = vmatprep.subr.bf16.mxu0 0
    %2708 = vmatpush1.bf16.msra.mxu0 %v1972
    %2709 = vmatprep.subr.bf16.mxu0 0
    %2710 = vmatpush1.bf16.msra.mxu0 %v1973
    %2711 = vmatprep.subr.bf16.mxu0 0
    %2712 = vmatpush1.bf16.msra.mxu0 %v1974
    %2713 = vmatprep.subr.bf16.mxu0 0
    %2714 = vmatpush1.bf16.msra.mxu0 %v1975
    %2715 = vmatprep.subr.bf16.mxu0 0
    %2716 = vmatpush1.bf16.msra.mxu0 %v1976
    %2717 = vmatprep.subr.bf16.mxu0 0
    %2718 = vmatpush1.bf16.msra.mxu0 %v1977
    %2719 = vmatprep.subr.bf16.mxu0 0
    %2720 = vmatpush1.bf16.msra.mxu0 %v1978
    %2721 = vmatprep.subr.bf16.mxu0 0
    %2722 = vmatpush1.bf16.msra.mxu0 %v1979
    %2723 = vmatprep.subr.bf16.mxu0 0
    %2724 = vmatpush1.bf16.msra.mxu0 %v1980
    %2725 = vmatprep.mubr.bf16.mxu0 %v714
    %2726 = vmatmul.mubr.bf16.gmra.mrb[0].mxu0 %v712
    %v2727 = vpop.f32.mrb[0].mxu0
    %v2728 = vadd.f32 %v2688, %v2727
    %v2729 = vpop.f32.mrb[0].mxu0
    %v2730 = vpop.f32.mrb[0].mxu0
    %v2731 = vpop.f32.mrb[0].mxu0
    %2732 = vdwg.mxu0
    %2733 = vmatprep.subr.bf16.mxu0 0
    %2734 = vmatpush1.bf16.msra.mxu0 %v1981
    %2735 = vmatprep.subr.bf16.mxu0 0
    %2736 = vmatpush1.bf16.msra.mxu0 %v1982
    %2737 = vmatprep.subr.bf16.mxu0 0
    %2738 = vmatpush1.bf16.msra.mxu0 %v1983
    %2739 = vmatprep.subr.bf16.mxu0 0
    %2740 = vmatpush1.bf16.msra.mxu0 %v1984
    %2741 = vmatprep.subr.bf16.mxu0 0
    %2742 = vmatpush1.bf16.msra.mxu0 %v1985
    %2743 = vmatprep.subr.bf16.mxu0 0
    %2744 = vmatpush1.bf16.msra.mxu0 %v1986
    %2745 = vmatprep.subr.bf16.mxu0 0
    %2746 = vmatpush1.bf16.msra.mxu0 %v1987
    %2747 = vmatprep.subr.bf16.mxu0 0
    %2748 = vmatpush1.bf16.msra.mxu0 %v1988
    %2749 = vmatprep.subr.bf16.mxu0 0
    %2750 = vmatpush1.bf16.msra.mxu0 %v1989
    %2751 = vmatprep.subr.bf16.mxu0 0
    %2752 = vmatpush1.bf16.msra.mxu0 %v1990
    %2753 = vmatprep.subr.bf16.mxu0 0
    %2754 = vmatpush1.bf16.msra.mxu0 %v1991
    %2755 = vmatprep.subr.bf16.mxu0 0
    %2756 = vmatpush1.bf16.msra.mxu0 %v1992
    %2757 = vmatprep.subr.bf16.mxu0 0
    %2758 = vmatpush1.bf16.msra.mxu0 %v1993
    %2759 = vmatprep.subr.bf16.mxu0 0
    %2760 = vmatpush1.bf16.msra.mxu0 %v1994
    %2761 = vmatprep.subr.bf16.mxu0 0
    %2762 = vmatpush1.bf16.msra.mxu0 %v1995
    %2763 = vmatprep.subr.bf16.mxu0 0
    %2764 = vmatpush1.bf16.msra.mxu0 %v1996
    %2765 = vmatprep.mubr.bf16.mxu0 %v711
    %2766 = vmatmul.mubr.bf16.gmra.mrb[0].mxu0 %v697
    %v2767 = vpop.f32.mrb[0].mxu0
    %v2768 = vadd.f32 %v2728, %v2767
    %v2769 = vpop.f32.mrb[0].mxu0
    %v2770 = vpop.f32.mrb[0].mxu0
    %v2771 = vpop.f32.mrb[0].mxu0
    %2772 = vdwg.mxu0
    %2773 = vmatprep.subr.bf16.mxu0 0
    %2774 = vmatpush1.bf16.msra.mxu0 %v1997
    %2775 = vmatprep.subr.bf16.mxu0 0
    %2776 = vmatpush1.bf16.msra.mxu0 %v1998
    %2777 = vmatprep.subr.bf16.mxu0 0
    %2778 = vmatpush1.bf16.msra.mxu0 %v1999
    %2779 = vmatprep.subr.bf16.mxu0 0
    %2780 = vmatpush1.bf16.msra.mxu0 %v2000
    %2781 = vmatprep.subr.bf16.mxu0 0
    %2782 = vmatpush1.bf16.msra.mxu0 %v2001
    %2783 = vmatprep.subr.bf16.mxu0 0
    %2784 = vmatpush1.bf16.msra.mxu0 %v2002
    %2785 = vmatprep.subr.bf16.mxu0 0
    %2786 = vmatpush1.bf16.msra.mxu0 %v2003
    %2787 = vmatprep.subr.bf16.mxu0 0
    %2788 = vmatpush1.bf16.msra.mxu0 %v2004
    %2789 = vmatprep.subr.bf16.mxu0 0
    %2790 = vmatpush1.bf16.msra.mxu0 %v2005
    %2791 = vmatprep.subr.bf16.mxu0 0
    %2792 = vmatpush1.bf16.msra.mxu0 %v2006
    %2793 = vmatprep.subr.bf16.mxu0 0
    %2794 = vmatpush1.bf16.msra.mxu0 %v2007
    %2795 = vmatprep.subr.bf16.mxu0 0
    %2796 = vmatpush1.bf16.msra.mxu0 %v2008
    %2797 = vmatprep.subr.bf16.mxu0 0
    %2798 = vmatpush1.bf16.msra.mxu0 %v2009
    %2799 = vmatprep.subr.bf16.mxu0 0
    %2800 = vmatpush1.bf16.msra.mxu0 %v2010
    %2801 = vmatprep.subr.bf16.mxu0 0
    %2802 = vmatpush1.bf16.msra.mxu0 %v2011
    %2803 = vmatprep.subr.bf16.mxu0 0
    %2804 = vmatpush1.bf16.msra.mxu0 %v2012
    %2805 = vmatprep.mubr.bf16.mxu0 %v715
    %2806 = vmatmul.mubr.bf16.gmra.mrb[0].mxu0 %v713
    %v2807 = vpop.f32.mrb[0].mxu0
    %v2808 = vadd.f32 %v2768, %v2807
    %v2809 = vpop.f32.mrb[0].mxu0
    %v2810 = vpop.f32.mrb[0].mxu0
    %v2811 = vpop.f32.mrb[0].mxu0
    %2812 = vdwg.mxu0
    %2813 = vmatprep.subr.bf16.mxu0 0
    %2814 = vmatpush1.bf16.msra.mxu0 %v2013
    %2815 = vmatprep.subr.bf16.mxu0 0
    %2816 = vmatpush1.bf16.msra.mxu0 %v2014
    %2817 = vmatprep.subr.bf16.mxu0 0
    %2818 = vmatpush1.bf16.msra.mxu0 %v2015
    %2819 = vmatprep.subr.bf16.mxu0 0
    %2820 = vmatpush1.bf16.msra.mxu0 %v2016
    %2821 = vmatprep.subr.bf16.mxu0 0
    %2822 = vmatpush1.bf16.msra.mxu0 %v2017
    %2823 = vmatprep.subr.bf16.mxu0 0
    %2824 = vmatpush1.bf16.msra.mxu0 %v2018
    %2825 = vmatprep.subr.bf16.mxu0 0
    %2826 = vmatpush1.bf16.msra.mxu0 %v2019
    %2827 = vmatprep.subr.bf16.mxu0 0
    %2828 = vmatpush1.bf16.msra.mxu0 %v2020
    %2829 = vmatprep.subr.bf16.mxu0 0
    %2830 = vmatpush1.bf16.msra.mxu0 %v2021
    %2831 = vmatprep.subr.bf16.mxu0 0
    %2832 = vmatpush1.bf16.msra.mxu0 %v2022
    %2833 = vmatprep.subr.bf16.mxu0 0
    %2834 = vmatpush1.bf16.msra.mxu0 %v2023
    %2835 = vmatprep.subr.bf16.mxu0 0
    %2836 = vmatpush1.bf16.msra.mxu0 %v2024
    %2837 = vmatprep.subr.bf16.mxu0 0
    %2838 = vmatpush1.bf16.msra.mxu0 %v2025
    %2839 = vmatprep.subr.bf16.mxu0 0
    %2840 = vmatpush1.bf16.msra.mxu0 %v2026
    %2841 = vmatprep.subr.bf16.mxu0 0
    %2842 = vmatpush1.bf16.msra.mxu0 %v2027
    %2843 = vmatprep.subr.bf16.mxu0 0
    %2844 = vmatpush1.bf16.msra.mxu0 %v2028
    %2845 = vmatprep.mubr.bf16.mxu0 %v753
    %2846 = vmatmul.mubr.bf16.gmra.mrb[0].mxu0 %v739
    %v2847 = vpop.f32.mrb[0].mxu0
    %v2848 = vadd.f32 %v2808, %v2847
    %v2849 = vpop.f32.mrb[0].mxu0
    %v2850 = vpop.f32.mrb[0].mxu0
    %v2851 = vpop.f32.mrb[0].mxu0
    %2852 = vdwg.mxu0
    %2853 = vmatprep.subr.bf16.mxu0 0
    %2854 = vmatpush1.bf16.msra.mxu0 %v2029
    %2855 = vmatprep.subr.bf16.mxu0 0
    %2856 = vmatpush1.bf16.msra.mxu0 %v2030
    %2857 = vmatprep.subr.bf16.mxu0 0
    %2858 = vmatpush1.bf16.msra.mxu0 %v2031
    %2859 = vmatprep.subr.bf16.mxu0 0
    %2860 = vmatpush1.bf16.msra.mxu0 %v2032
    %2861 = vmatprep.subr.bf16.mxu0 0
    %2862 = vmatpush1.bf16.msra.mxu0 %v2033
    %2863 = vmatprep.subr.bf16.mxu0 0
    %2864 = vmatpush1.bf16.msra.mxu0 %v2034
    %2865 = vmatprep.subr.bf16.mxu0 0
    %2866 = vmatpush1.bf16.msra.mxu0 %v2035
    %2867 = vmatprep.subr.bf16.mxu0 0
    %2868 = vmatpush1.bf16.msra.mxu0 %v2036
    %2869 = vmatprep.subr.bf16.mxu0 0
    %2870 = vmatpush1.bf16.msra.mxu0 %v2037
    %2871 = vmatprep.subr.bf16.mxu0 0
    %2872 = vmatpush1.bf16.msra.mxu0 %v2038
    %2873 = vmatprep.subr.bf16.mxu0 0
    %2874 = vmatpush1.bf16.msra.mxu0 %v2039
    %2875 = vmatprep.subr.bf16.mxu0 0
    %2876 = vmatpush1.bf16.msra.mxu0 %v2040
    %2877 = vmatprep.subr.bf16.mxu0 0
    %2878 = vmatpush1.bf16.msra.mxu0 %v2041
    %2879 = vmatprep.subr.bf16.mxu0 0
    %2880 = vmatpush1.bf16.msra.mxu0 %v2042
    %2881 = vmatprep.subr.bf16.mxu0 0
    %2882 = vmatpush1.bf16.msra.mxu0 %v2043
    %2883 = vmatprep.subr.bf16.mxu0 0
    %2884 = vmatpush1.bf16.msra.mxu0 %v2044
    %2885 = vmatprep.mubr.bf16.mxu0 %v763
    %2886 = vmatmul.mubr.bf16.gmra.mrb[0].mxu0 %v761
    %v2887 = vpop.f32.mrb[0].mxu0
    %v2888 = vadd.f32 %v2848, %v2887
    %v2889 = vpop.f32.mrb[0].mxu0
    %v2890 = vpop.f32.mrb[0].mxu0
    %v2891 = vpop.f32.mrb[0].mxu0
    %2892 = vdwg.mxu0
    %2893 = vmatprep.subr.bf16.mxu0 0
    %2894 = vmatpush1.bf16.msra.mxu0 %v2045
    %2895 = vmatprep.subr.bf16.mxu0 0
    %2896 = vmatpush1.bf16.msra.mxu0 %v2046
    %2897 = vmatprep.subr.bf16.mxu0 0
    %2898 = vmatpush1.bf16.msra.mxu0 %v2047
    %2899 = vmatprep.subr.bf16.mxu0 0
    %2900 = vmatpush1.bf16.msra.mxu0 %v2048
    %2901 = vmatprep.subr.bf16.mxu0 0
    %2902 = vmatpush1.bf16.msra.mxu0 %v2049
    %2903 = vmatprep.subr.bf16.mxu0 0
    %2904 = vmatpush1.bf16.msra.mxu0 %v2050
    %2905 = vmatprep.subr.bf16.mxu0 0
    %2906 = vmatpush1.bf16.msra.mxu0 %v2051
    %2907 = vmatprep.subr.bf16.mxu0 0
    %2908 = vmatpush1.bf16.msra.mxu0 %v2052
    %2909 = vmatprep.subr.bf16.mxu0 0
    %2910 = vmatpush1.bf16.msra.mxu0 %v2053
    %2911 = vmatprep.subr.bf16.mxu0 0
    %2912 = vmatpush1.bf16.msra.mxu0 %v2054
    %2913 = vmatprep.subr.bf16.mxu0 0
    %2914 = vmatpush1.bf16.msra.mxu0 %v2055
    %2915 = vmatprep.subr.bf16.mxu0 0
    %2916 = vmatpush1.bf16.msra.mxu0 %v2056
    %2917 = vmatprep.subr.bf16.mxu0 0
    %2918 = vmatpush1.bf16.msra.mxu0 %v2057
    %2919 = vmatprep.subr.bf16.mxu0 0
    %2920 = vmatpush1.bf16.msra.mxu0 %v2058
    %2921 = vmatprep.subr.bf16.mxu0 0
    %2922 = vmatpush1.bf16.msra.mxu0 %v2059
    %2923 = vmatprep.subr.bf16.mxu0 0
    %2924 = vmatpush1.bf16.msra.mxu0 %v2060
    %2925 = vmatprep.mubr.bf16.mxu0 %v760
    %2926 = vmatmul.mubr.bf16.gmra.mrb[0].mxu0 %v746
    %v2927 = vpop.f32.mrb[0].mxu0
    %v2928 = vadd.f32 %v2888, %v2927
    %v2929 = vpop.f32.mrb[0].mxu0
    %v2930 = vpop.f32.mrb[0].mxu0
    %v2931 = vpop.f32.mrb[0].mxu0
    %2932 = vdwg.mxu0
    %2933 = vmatprep.subr.bf16.mxu0 0
    %2934 = vmatpush1.bf16.msra.mxu0 %v2061
    %2935 = vmatprep.subr.bf16.mxu0 0
    %2936 = vmatpush1.bf16.msra.mxu0 %v2062
    %2937 = vmatprep.subr.bf16.mxu0 0
    %2938 = vmatpush1.bf16.msra.mxu0 %v2063
    %2939 = vmatprep.subr.bf16.mxu0 0
    %2940 = vmatpush1.bf16.msra.mxu0 %v2064
    %2941 = vmatprep.subr.bf16.mxu0 0
    %2942 = vmatpush1.bf16.msra.mxu0 %v2065
    %2943 = vmatprep.subr.bf16.mxu0 0
    %2944 = vmatpush1.bf16.msra.mxu0 %v2066
    %2945 = vmatprep.subr.bf16.mxu0 0
    %2946 = vmatpush1.bf16.msra.mxu0 %v2067
    %2947 = vmatprep.subr.bf16.mxu0 0
    %2948 = vmatpush1.bf16.msra.mxu0 %v2068
    %2949 = vmatprep.subr.bf16.mxu0 0
    %2950 = vmatpush1.bf16.msra.mxu0 %v2069
    %2951 = vmatprep.subr.bf16.mxu0 0
    %2952 = vmatpush1.bf16.msra.mxu0 %v2070
    %2953 = vmatprep.subr.bf16.mxu0 0
    %2954 = vmatpush1.bf16.msra.mxu0 %v2071
    %2955 = vmatprep.subr.bf16.mxu0 0
    %2956 = vmatpush1.bf16.msra.mxu0 %v2072
    %2957 = vmatprep.subr.bf16.mxu0 0
    %2958 = vmatpush1.bf16.msra.mxu0 %v2073
    %2959 = vmatprep.subr.bf16.mxu0 0
    %2960 = vmatpush1.bf16.msra.mxu0 %v2074
    %2961 = vmatprep.subr.bf16.mxu0 0
    %2962 = vmatpush1.bf16.msra.mxu0 %v2075
    %2963 = vmatprep.subr.bf16.mxu0 0
    %2964 = vmatpush1.bf16.msra.mxu0 %v2076
    %2965 = vmatprep.mubr.bf16.mxu0 %v764
    %2966 = vmatmul.mubr.bf16.gmra.mrb[0].mxu0 %v762
    %v2967 = vpop.f32.mrb[0].mxu0
    %v2968 = vadd.f32 %v2928, %v2967
    %v2969 = vpop.f32.mrb[0].mxu0
    %v2970 = vpop.f32.mrb[0].mxu0
    %v2971 = vpop.f32.mrb[0].mxu0
    %2972 = vdwg.mxu0
    %2973 = vst [vmem:[#allocation7] sm:$0x3] %v2968
    // Predicated region
    $region22: #{tpu_custom_call.1} parent=1 // pred_check
      _
    $region23: #{tpu_custom_call.1} parent=1 // pred_check_branch
      %2975 = sbr.rel (0) target = $region25
    $region24: #{tpu_custom_call.1} parent=1 // pred_region
      %s2977 = ssub.s32 32, 32
      %2978 = vsyncadd [#allocation4], %s2977
      %s2980 = sshll.u32 [#allocation7], 4
      %s2981 = int_to_ptr.vmem [resolvable:$true] %s2980
      %2983 = dma.vmem_to_hbm [thread:$0]  %s2981, 32, %s3, [#allocation4]
    $region25: #{tpu_custom_call.1} parent=1 // pred_fallthru
      _
    // Predicated region
    $region26: #{tpu_custom_call.1} parent=1 // pred_check
      _
    $region27: #{tpu_custom_call.1} parent=1 // pred_check_branch
      %2985 = sbr.rel (0) target = $region29
    $region28: #{tpu_custom_call.1} parent=1 // pred_region
      %2986 = dma.done [#allocation4], 32
    $region29: #{tpu_custom_call.1} parent=1 // pred_fallthru
      _
    %2987 = vsyncpa [#allocation3], 1
    %2988 = vsyncpa [#allocation6], 1
    %2989 = vsyncpa [#allocation4], 1

</llo_original>
